<compile_context>
chip_gen: v5e
topology: v5e:2x2
jax: 0.10.0
libtpu: 0.0.40
codegen_flags: <defaults>
</compile_context>

<pallas_src>
import functools

import jax
import jax.numpy as jnp
import numpy as np
from jax.experimental import pallas as pl
from jax.experimental.pallas import tpu as pltpu

# ----------------------------- config ---------------------------------------
ROI_DIM = 32          # in_channels
HIDDEN_DIM = 32
NUM_ITER = 2
NUM_OBJ_CLASSES = 8
NUM_PREDICATES = 10

PAD_OUT = 4 * HIDDEN_DIM   # 128: lane-dense width for classifier outputs & GRU packed weights
assert PAD_OUT == 128 and PAD_OUT >= max(NUM_OBJ_CLASSES, NUM_PREDICATES)

_VMEM = pl.BlockSpec(memory_space=pltpu.MemorySpace.VMEM)


def _round_up(n, m):
    return ((n + m - 1) // m) * m


# ----------------------------- fused Pallas kernel ---------------------------
def _imp_fused_kernel(
    # data
    x_ref, u_ref, gather_ref, scatter_ref,
    # packed weights / biases
    wpack_ref, wsmall_ref, bpack_ref,
    # outputs (lane-dense padded)
    obj_out_ref, rel_out_ref,
    *, H, num_iter):
    f32 = jnp.float32
    roi = x_ref.shape[1]
    r_pad = gather_ref.shape[0] // 2

    # ---- unpack packed buffers (static slices, loaded once / hoisted) ----
    node_w = wpack_ref[0:2 * H, :]                  # (2H, 4H) packed GRU weight
    edge_w = wpack_ref[2 * H:4 * H, :]              # (2H, 4H)
    obj_fc_w = wpack_ref[4 * H:5 * H, :]            # (H, PAD_OUT)
    rel_fc_w = wpack_ref[5 * H:6 * H, :]            # (H, PAD_OUT)

    obj_un_w = wsmall_ref[0:roi, :]                 # (roi, H)
    edge_un_w = wsmall_ref[roi:2 * roi, :]          # (roi, H)
    gate_w = wsmall_ref[2 * roi:2 * roi + 3 * H, :]  # (3H, H) — real gate cols 0..3

    b_all = bpack_ref[...]                          # (8, PAD_OUT)
    node_b = b_all[0:1, :]                          # (1, 4H) packed GRU bias
    edge_b = b_all[1:2, :]
    obj_fc_b = b_all[2:3, :]
    rel_fc_b = b_all[3:4, :]
    obj_un_b = b_all[4:5, 0:H]
    edge_un_b = b_all[5:6, 0:H]
    gate_b = b_all[6:7, 0:H]

    # ---- GRU helpers (PyTorch nn.GRUCell semantics, one fused matmul) ----
    def gru_tail(g, h):
        r = jax.nn.sigmoid(g[:, 0:H])
        z = jax.nn.sigmoid(g[:, H:2 * H])
        n = jnp.tanh(g[:, 2 * H:3 * H] + r * g[:, 3 * H:4 * H])
        if h is None:                     # initial step, h == 0
            return (1.0 - z) * n
        return (1.0 - z) * n + z * h

    def gru_first(x, w_full, b):
        # h == 0: only the input-weight rows matter; b_hh is folded into b.
        g = jnp.dot(x, w_full[0:H, :], preferred_element_type=f32) + b
        return gru_tail(g, None)

    def gru(x, h, w_full, b):
        xh = jnp.concatenate([x, h], axis=1)        # (N, 2H)
        g = jnp.dot(xh, w_full, preferred_element_type=f32) + b
        return gru_tail(g, h)

    # ---- unary projections ----
    obj_rep = jnp.dot(x_ref[...], obj_un_w, preferred_element_type=f32) + obj_un_b
    rel_rep = jnp.maximum(
        jnp.dot(u_ref[...], edge_un_w, preferred_element_type=f32) + edge_un_b, 0.0)

    # ---- initial GRU steps with zero hidden state ----
    vert = gru_first(obj_rep, node_w, node_b)       # (O_pad, H)
    edge = gru_first(rel_rep, edge_w, edge_b)       # (R_pad, H)

    # One-hot matrices stored bf16 (exact 0/1) — upcast once, keep all math f32.
    gather = gather_ref[...].astype(f32)            # (2R_pad, O_pad) = [sub_gather; obj_gather]
    scatter = scatter_ref[...].astype(f32)          # (O_pad, 2R_pad) = [sub2rel | obj2rel]

    # ---- message-passing iterations (fully unrolled, all in VMEM/vregs) ----
    for _ in range(num_iter):
        # Subject + object gathers in one MXU matmul.
        sv_ov = jnp.dot(gather, vert, preferred_element_type=f32)   # (2R_pad, H)
        sub_vert = sv_ov[0:r_pad, :]
        obj_vert = sv_ov[r_pad:2 * r_pad, :]

        # All four sigmoid gates in one matmul (uses OLD edge state, matches torch).
        cat = jnp.concatenate([sub_vert, obj_vert, edge], axis=1)   # (R_pad, 3H)
        gates = jax.nn.sigmoid(
            jnp.dot(cat, gate_w, preferred_element_type=f32) + gate_b)

        weighted = gates[:, 0:1] * sub_vert + gates[:, 1:2] * obj_vert
        new_edge = gru(weighted, edge, edge_w, edge_b)

        # Both scatters in one matmul: [sub2rel | obj2rel] @ [pre_out; pre_in].
        pre = jnp.concatenate(
            [gates[:, 2:3] * edge, gates[:, 3:4] * edge], axis=0)   # (2R_pad, H)
        vert_ctx = jnp.dot(scatter, pre, preferred_element_type=f32)
        new_vert = gru(vert_ctx, vert, node_w, node_b)

        vert, edge = new_vert, new_edge

    # ---- final classifiers (lane-dense padded outputs) ----
    obj_out_ref[...] = (jnp.dot(vert, obj_fc_w, preferred_element_type=f32)
                        + obj_fc_b).astype(obj_out_ref.dtype)
    rel_out_ref[...] = (jnp.dot(edge, rel_fc_w, preferred_element_type=f32)
                        + rel_fc_b).astype(rel_out_ref.dtype)


# ----------------------------- parameter init --------------------------------
def _linear_params(key, out_dim, in_dim):
    k1, k2 = jax.random.split(key)
    bound = 1.0 / np.sqrt(in_dim)
    W = jax.random.uniform(k1, (out_dim, in_dim), jnp.float32, -bound, bound)
    b = jax.random.uniform(k2, (out_dim,), jnp.float32, -bound, bound)
    return W, b


def _gru_params(key, hidden):
    k1, k2, k3, k4 = jax.random.split(key, 4)
    bound = 1.0 / np.sqrt(hidden)
    W_ih = jax.random.uniform(k1, (3 * hidden, hidden), jnp.float32, -bound, bound)
    W_hh = jax.random.uniform(k2, (3 * hidden, hidden), jnp.float32, -bound, bound)
    b_ih = jax.random.uniform(k3, (3 * hidden,), jnp.float32, -bound, bound)
    b_hh = jax.random.uniform(k4, (3 * hidden,), jnp.float32, -bound, bound)
    return W_ih, W_hh, b_ih, b_hh


def init_params(key):
    ks = jax.random.split(key, 10)
    return dict(
        obj_unary=_linear_params(ks[0], HIDDEN_DIM, ROI_DIM),
        edge_unary=_linear_params(ks[1], HIDDEN_DIM, ROI_DIM),
        node_gru=_gru_params(ks[2], HIDDEN_DIM),
        edge_gru=_gru_params(ks[3], HIDDEN_DIM),
        sub_vert_w=_linear_params(ks[4], 1, 2 * HIDDEN_DIM),
        obj_vert_w=_linear_params(ks[5], 1, 2 * HIDDEN_DIM),
        out_edge_w=_linear_params(ks[6], 1, 2 * HIDDEN_DIM),
        in_edge_w=_linear_params(ks[7], 1, 2 * HIDDEN_DIM),
        obj_fc=_linear_params(ks[8], NUM_OBJ_CLASSES, HIDDEN_DIM),
        rel_fc=_linear_params(ks[9], NUM_PREDICATES, HIDDEN_DIM),
    )


# ----------------------------- parameter packing (once) ----------------------
def prepare_params(params):
    """Pre-pack all weights/biases into 3 contiguous f32 buffers (done once)."""
    H = HIDDEN_DIM
    W = PAD_OUT

    def pad_cols(a, width):
        return jnp.pad(a, ((0, 0), (0, width - a.shape[1])))

    def pack_gru(p):
        # Packed weight (2H, 4H): columns [r: Wx_r;Wh_r | z: Wx_z;Wh_z | n_i: Wx_n;0 | n_h: 0;Wh_n]
        W_ih, W_hh, b_ih, b_hh = p
        Wx, Wh = W_ih.T, W_hh.T                           # (H, 3H)
        Z = jnp.zeros((H, H), jnp.float32)
        top = jnp.concatenate([Wx[:, :H], Wx[:, H:2 * H], Wx[:, 2 * H:], Z], axis=1)
        bot = jnp.concatenate([Wh[:, :H], Wh[:, H:2 * H], Z, Wh[:, 2 * H:]], axis=1)
        w_packed = jnp.concatenate([top, bot], axis=0)    # (2H, 4H)
        b_packed = jnp.concatenate(
            [b_ih[:H] + b_hh[:H], b_ih[H:2 * H] + b_hh[H:2 * H],
             b_ih[2 * H:], b_hh[2 * H:]]).reshape(1, 4 * H)
        return w_packed, b_packed

    node_w, node_b = pack_gru(params['node_gru'])
    edge_w, edge_b = pack_gru(params['edge_gru'])

    # Gate pack (3H, H): row blocks [sub_vert | obj_vert | edge], real gate columns 0..3.
    # Gate column order: 0=sub_vert_w, 1=obj_vert_w, 2=out_edge_w, 3=in_edge_w.
    gate_w = jnp.zeros((3 * H, H), jnp.float32)
    gate_b = jnp.zeros((1, H), jnp.float32)
    gate_ps = [params['sub_vert_w'], params['obj_vert_w'],
               params['out_edge_w'], params['in_edge_w']]
    for k, (Wk, bk) in enumerate(gate_ps):
        row_off = 0 if k in (0, 2) else H         # gates 0,2 read sub_vert; 1,3 read obj_vert
        gate_w = gate_w.at[row_off:row_off + H, k].set(Wk[0, :H])
        gate_w = gate_w.at[2 * H:3 * H, k].set(Wk[0, H:])
        gate_b = gate_b.at[0, k].set(bk[0])

    obj_un_W, obj_un_b = params['obj_unary']      # (H, ROI), (H,)
    edge_un_W, edge_un_b = params['edge_unary']
    obj_fc_W, obj_fc_b = params['obj_fc']         # (C, H), (C,)
    rel_fc_W, rel_fc_b = params['rel_fc']

    wpack = jnp.concatenate(
        [node_w, edge_w, pad_cols(obj_fc_W.T, W), pad_cols(rel_fc_W.T, W)], axis=0)  # (6H, 128)
    wsmall = jnp.concatenate([obj_un_W.T, edge_un_W.T, gate_w], axis=0)              # (2*ROI+3H, H)

    def brow(vec_1d):
        return pad_cols(jnp.asarray(vec_1d, jnp.float32).reshape(1, -1), W)

    bpack = jnp.concatenate(
        [node_b, edge_b, brow(obj_fc_b), brow(rel_fc_b),
         brow(obj_un_b), brow(edge_un_b), pad_cols(gate_b, W),
         jnp.zeros((1, W), jnp.float32)], axis=0)                                    # (8, 128)

    return dict(wpack=wpack, wsmall=wsmall, bpack=bpack)


# ----------------------------- forward (single fused pallas_call) ------------
@jax.jit
def imp_forward(prep, x, union_features, sub_gather, obj_gather, sub2rel, obj2rel):
    O = x.shape[0]
    R = union_features.shape[0]
    O_pad = _round_up(max(O, 8), 8)
    R_pad = _round_up(max(R, 8), 8)

    x_p = jnp.pad(x, ((0, O_pad - O), (0, 0)))
    u_p = jnp.pad(union_features, ((0, R_pad - R), (0, 0)))

    # Combined one-hot gather (2R_pad, O_pad) and scatter (O_pad, 2R_pad); bf16 is exact for 0/1.
    sg = jnp.pad(sub_gather, ((0, R_pad - R), (0, O_pad - O)))
    og = jnp.pad(obj_gather, ((0, R_pad - R), (0, O_pad - O)))
    gather = jnp.concatenate([sg, og], axis=0).astype(jnp.bfloat16)
    s2r = jnp.pad(sub2rel, ((0, O_pad - O), (0, R_pad - R)))
    o2r = jnp.pad(obj2rel, ((0, O_pad - O), (0, R_pad - R)))
    scatter = jnp.concatenate([s2r, o2r], axis=1).astype(jnp.bfloat16)

    kernel = functools.partial(_imp_fused_kernel, H=HIDDEN_DIM, num_iter=NUM_ITER)
    obj_pad, rel_pad = pl.pallas_call(
        kernel,
        out_shape=(jax.ShapeDtypeStruct((O_pad, PAD_OUT), jnp.float32),
                   jax.ShapeDtypeStruct((R_pad, PAD_OUT), jnp.float32)),
        in_specs=[_VMEM] * 7,
        out_specs=(_VMEM, _VMEM),
    )(x_p, u_p, gather, scatter, prep['wpack'], prep['wsmall'], prep['bpack'])

    return obj_pad[:O, :NUM_OBJ_CLASSES], rel_pad[:R, :NUM_PREDICATES]


# ----------------------------- pure-JAX reference ----------------------------
def imp_forward_ref(params, x, union_features, sub_inds, obj_inds, sub2rel, obj2rel):
    H = HIDDEN_DIM

    def linear(v, W, b):
        return v @ W.T + b

    def gru(v, h, p):
        W_ih, W_hh, b_ih, b_hh = p
        gi = v @ W_ih.T + b_ih
        gh = h @ W_hh.T + b_hh
        r = jax.nn.sigmoid(gi[:, :H] + gh[:, :H])
        z = jax.nn.sigmoid(gi[:, H:2 * H] + gh[:, H:2 * H])
        n = jnp.tanh(gi[:, 2 * H:] + r * gh[:, 2 * H:])
        return (1.0 - z) * n + z * h

    def gate(a, b_, p):
        Wg, bias = p
        return jax.nn.sigmoid(jnp.concatenate([a, b_], axis=1) @ Wg.T + bias)

    obj_rep = linear(x, *params['obj_unary'])
    rel_rep = jax.nn.relu(linear(union_features, *params['edge_unary']))
    vert = gru(obj_rep, jnp.zeros_like(obj_rep), params['node_gru'])
    edge = gru(rel_rep, jnp.zeros_like(rel_rep), params['edge_gru'])
    for _ in range(NUM_ITER):
        sub_vert = vert[sub_inds]
        obj_vert = vert[obj_inds]
        weighted_sub = gate(sub_vert, edge, params['sub_vert_w']) * sub_vert
        weighted_obj = gate(obj_vert, edge, params['obj_vert_w']) * obj_vert
        new_edge = gru(weighted_sub + weighted_obj, edge, params['edge_gru'])
        pre_out = gate(sub_vert, edge, params['out_edge_w']) * edge
        pre_in = gate(obj_vert, edge, params['in_edge_w']) * edge
        vert_ctx = sub2rel @ pre_out + obj2rel @ pre_in
        new_vert = gru(vert_ctx, vert, params['node_gru'])
        vert, edge = new_vert, new_edge
    return linear(vert, *params['obj_fc']), linear(edge, *params['rel_fc'])


# ----------------------------- demo -----------------------------------------
if __name__ == "__main__":
    key = jax.random.PRNGKey(0)
    k_par, k_x, k_u, k_p1, k_p2 = jax.random.split(key, 5)

    params = init_params(k_par)
    prep = prepare_params(params)

    # Two "images": 4 objects / 6 relations each.
    num_objs = [4, 4]
    num_rels = [6, 6]
    obj_count = sum(num_objs)           # 8
    rel_count = sum(num_rels)           # 12

    x = jax.random.normal(k_x, (obj_count, ROI_DIM), jnp.float32)
    union_features = jax.random.normal(k_u, (rel_count, ROI_DIM), jnp.float32)

    rel_pair_idxes = [
        jax.random.randint(k_p1, (num_rels[0], 2), 0, num_objs[0]),
        jax.random.randint(k_p2, (num_rels[1], 2), 0, num_objs[1]),
    ]

    # Build global gather indices and scatter matrices (glue, matches the torch loop).
    sub_list, obj_list = [], []
    sub2rel = jnp.zeros((obj_count, rel_count), jnp.float32)
    obj2rel = jnp.zeros((obj_count, rel_count), jnp.float32)
    obj_offset, rel_offset = 0, 0
    for pair_idx, n_obj in zip(rel_pair_idxes, num_objs):
        n_rel = pair_idx.shape[0]
        sub_idx = pair_idx[:, 0].astype(jnp.int32) + obj_offset
        obj_idx = pair_idx[:, 1].astype(jnp.int32) + obj_offset
        rel_idx = jnp.arange(n_rel, dtype=jnp.int32) + rel_offset
        sub_list.append(sub_idx)
        obj_list.append(obj_idx)
        sub2rel = sub2rel.at[sub_idx, rel_idx].set(1.0)
        obj2rel = obj2rel.at[obj_idx, rel_idx].set(1.0)
        obj_offset += n_obj
        rel_offset += n_rel
    sub_global_inds = jnp.concatenate(sub_list, axis=0)
    obj_global_inds = jnp.concatenate(obj_list, axis=0)

    # One-hot gather matrices (rows select vert rows) = transposes of the scatter mats.
    sub_gather = sub2rel.T   # (R, O)
    obj_gather = obj2rel.T   # (R, O)

    obj_dists, rel_dists = imp_forward(
        prep, x, union_features, sub_gather, obj_gather, sub2rel, obj2rel)
    jax.block_until_ready((obj_dists, rel_dists))

    # Correctness check against a pure-JAX reference of the PyTorch module (tight, all-f32 math).
    obj_ref, rel_ref = imp_forward_ref(
        params, x, union_features, sub_global_inds, obj_global_inds, sub2rel, obj2rel)
    np.testing.assert_allclose(np.asarray(obj_dists), np.asarray(obj_ref), rtol=1e-4, atol=1e-4)
    np.testing.assert_allclose(np.asarray(rel_dists), np.asarray(rel_ref), rtol=1e-4, atol=1e-4)

    assert obj_dists.shape == (obj_count, NUM_OBJ_CLASSES)
    assert rel_dists.shape == (rel_count, NUM_PREDICATES)
    assert bool(jnp.all(jnp.isfinite(obj_dists))) and bool(jnp.all(jnp.isfinite(rel_dists)))
    print("KERNEL_OK")
</pallas_src>

<mosaic_0001>
module attributes {stable_mosaic.version = 11 : i64} {
  func.func @_imp_fused_kernel(%arg0: memref<8x32xf32, #tpu.memory_space<vmem>>, %arg1: memref<16x32xf32, #tpu.memory_space<vmem>>, %arg2: memref<32x8xbf16, #tpu.memory_space<vmem>>, %arg3: memref<8x32xbf16, #tpu.memory_space<vmem>>, %arg4: memref<192x128xf32, #tpu.memory_space<vmem>>, %arg5: memref<160x32xf32, #tpu.memory_space<vmem>>, %arg6: memref<8x128xf32, #tpu.memory_space<vmem>>, %arg7: memref<8x128xf32, #tpu.memory_space<vmem>>, %arg8: memref<16x128xf32, #tpu.memory_space<vmem>>) attributes {dimension_semantics = [], scalar_prefetch = 0 : i64, scratch_operands = 0 : i64, tpu.core_type = #tpu.core_type<tc>} {
    %c0 = arith.constant 0 : index
    %c0_0 = arith.constant 0 : index
    %0 = vector.load %arg4[%c0, %c0_0] : memref<192x128xf32, #tpu.memory_space<vmem>>, vector<64x128xf32>
    %c64 = arith.constant 64 : index
    %c0_1 = arith.constant 0 : index
    %1 = vector.load %arg4[%c64, %c0_1] : memref<192x128xf32, #tpu.memory_space<vmem>>, vector<64x128xf32>
    %c128 = arith.constant 128 : index
    %c0_2 = arith.constant 0 : index
    %2 = vector.load %arg4[%c128, %c0_2] : memref<192x128xf32, #tpu.memory_space<vmem>>, vector<32x128xf32>
    %c160 = arith.constant 160 : index
    %c0_3 = arith.constant 0 : index
    %3 = vector.load %arg4[%c160, %c0_3] : memref<192x128xf32, #tpu.memory_space<vmem>>, vector<32x128xf32>
    %c0_4 = arith.constant 0 : index
    %c0_5 = arith.constant 0 : index
    %4 = vector.load %arg5[%c0_4, %c0_5] : memref<160x32xf32, #tpu.memory_space<vmem>>, vector<32x32xf32>
    %c32 = arith.constant 32 : index
    %c0_6 = arith.constant 0 : index
    %5 = vector.load %arg5[%c32, %c0_6] : memref<160x32xf32, #tpu.memory_space<vmem>>, vector<32x32xf32>
    %c64_7 = arith.constant 64 : index
    %c0_8 = arith.constant 0 : index
    %6 = vector.load %arg5[%c64_7, %c0_8] : memref<160x32xf32, #tpu.memory_space<vmem>>, vector<96x32xf32>
    %c0_9 = arith.constant 0 : index
    %c0_10 = arith.constant 0 : index
    %7 = vector.load %arg6[%c0_9, %c0_10] : memref<8x128xf32, #tpu.memory_space<vmem>>, vector<8x128xf32>
    %8 = vector.extract_strided_slice %7 {offsets = [0, 0], sizes = [1, 128], strides = [1, 1]} : vector<8x128xf32> to vector<1x128xf32>
    %9 = vector.extract_strided_slice %7 {offsets = [1, 0], sizes = [1, 128], strides = [1, 1]} : vector<8x128xf32> to vector<1x128xf32>
    %10 = vector.extract_strided_slice %7 {offsets = [2, 0], sizes = [1, 128], strides = [1, 1]} : vector<8x128xf32> to vector<1x128xf32>
    %11 = vector.extract_strided_slice %7 {offsets = [3, 0], sizes = [1, 128], strides = [1, 1]} : vector<8x128xf32> to vector<1x128xf32>
    %12 = vector.extract_strided_slice %7 {offsets = [4, 0], sizes = [1, 32], strides = [1, 1]} : vector<8x128xf32> to vector<1x32xf32>
    %13 = vector.extract_strided_slice %7 {offsets = [5, 0], sizes = [1, 32], strides = [1, 1]} : vector<8x128xf32> to vector<1x32xf32>
    %14 = vector.extract_strided_slice %7 {offsets = [6, 0], sizes = [1, 32], strides = [1, 1]} : vector<8x128xf32> to vector<1x32xf32>
    %c0_11 = arith.constant 0 : index
    %c0_12 = arith.constant 0 : index
    %15 = vector.load %arg0[%c0_11, %c0_12] : memref<8x32xf32, #tpu.memory_space<vmem>>, vector<8x32xf32>
    %cst = arith.constant dense<0.000000e+00> : vector<8x32xf32>
    %16 = tpu.matmul %15, %4, %cst {dimension_numbers = #tpu.dot_dimension_numbers<[1], [0], [0], [1], [0, 0, 1, 1], [], []>} : vector<8x32xf32>, vector<32x32xf32>, vector<8x32xf32> -> vector<8x32xf32>
    %17 = vector.broadcast %12 : vector<1x32xf32> to vector<8x32xf32>
    %18 = arith.addf %16, %17 : vector<8x32xf32>
    %c0_13 = arith.constant 0 : index
    %c0_14 = arith.constant 0 : index
    %19 = vector.load %arg1[%c0_13, %c0_14] : memref<16x32xf32, #tpu.memory_space<vmem>>, vector<16x32xf32>
    %cst_15 = arith.constant dense<0.000000e+00> : vector<16x32xf32>
    %20 = tpu.matmul %19, %5, %cst_15 {dimension_numbers = #tpu.dot_dimension_numbers<[1], [0], [0], [1], [0, 0, 1, 1], [], []>} : vector<16x32xf32>, vector<32x32xf32>, vector<16x32xf32> -> vector<16x32xf32>
    %21 = vector.broadcast %13 : vector<1x32xf32> to vector<16x32xf32>
    %22 = arith.addf %20, %21 : vector<16x32xf32>
    %cst_16 = arith.constant 0.000000e+00 : f32
    %23 = vector.broadcast %cst_16 : f32 to vector<16x32xf32>
    %24 = arith.maximumf %22, %23 : vector<16x32xf32>
    %25 = vector.extract_strided_slice %0 {offsets = [0, 0], sizes = [32, 128], strides = [1, 1]} : vector<64x128xf32> to vector<32x128xf32>
    %cst_17 = arith.constant dense<0.000000e+00> : vector<8x128xf32>
    %26 = tpu.matmul %18, %25, %cst_17 {dimension_numbers = #tpu.dot_dimension_numbers<[1], [0], [0], [1], [0, 0, 1, 1], [], []>} : vector<8x32xf32>, vector<32x128xf32>, vector<8x128xf32> -> vector<8x128xf32>
    %27 = vector.broadcast %8 : vector<1x128xf32> to vector<8x128xf32>
    %28 = arith.addf %26, %27 : vector<8x128xf32>
    %29 = vector.extract_strided_slice %28 {offsets = [0, 0], sizes = [8, 32], strides = [1, 1]} : vector<8x128xf32> to vector<8x32xf32>
    %30 = arith.negf %29 : vector<8x32xf32>
    %31 = math.exp %30 : vector<8x32xf32>
    %cst_18 = arith.constant 1.000000e+00 : f32
    %32 = vector.broadcast %cst_18 : f32 to vector<8x32xf32>
    %33 = arith.addf %32, %31 : vector<8x32xf32>
    %34 = arith.divf %32, %33 : vector<8x32xf32>
    %35 = vector.extract_strided_slice %28 {offsets = [0, 32], sizes = [8, 32], strides = [1, 1]} : vector<8x128xf32> to vector<8x32xf32>
    %36 = arith.negf %35 : vector<8x32xf32>
    %37 = math.exp %36 : vector<8x32xf32>
    %cst_19 = arith.constant 1.000000e+00 : f32
    %38 = vector.broadcast %cst_19 : f32 to vector<8x32xf32>
    %39 = arith.addf %38, %37 : vector<8x32xf32>
    %40 = arith.divf %38, %39 : vector<8x32xf32>
    %41 = vector.extract_strided_slice %28 {offsets = [0, 64], sizes = [8, 32], strides = [1, 1]} : vector<8x128xf32> to vector<8x32xf32>
    %42 = vector.extract_strided_slice %28 {offsets = [0, 96], sizes = [8, 32], strides = [1, 1]} : vector<8x128xf32> to vector<8x32xf32>
    %43 = arith.mulf %34, %42 : vector<8x32xf32>
    %44 = arith.addf %41, %43 : vector<8x32xf32>
    %45 = math.tanh %44 : vector<8x32xf32>
    %cst_20 = arith.constant 1.000000e+00 : f32
    %46 = vector.broadcast %cst_20 : f32 to vector<8x32xf32>
    %47 = arith.subf %46, %40 : vector<8x32xf32>
    %48 = arith.mulf %47, %45 : vector<8x32xf32>
    %49 = vector.extract_strided_slice %1 {offsets = [0, 0], sizes = [32, 128], strides = [1, 1]} : vector<64x128xf32> to vector<32x128xf32>
    %cst_21 = arith.constant dense<0.000000e+00> : vector<16x128xf32>
    %50 = tpu.matmul %24, %49, %cst_21 {dimension_numbers = #tpu.dot_dimension_numbers<[1], [0], [0], [1], [0, 0, 1, 1], [], []>} : vector<16x32xf32>, vector<32x128xf32>, vector<16x128xf32> -> vector<16x128xf32>
    %51 = vector.broadcast %9 : vector<1x128xf32> to vector<16x128xf32>
    %52 = arith.addf %50, %51 : vector<16x128xf32>
    %53 = vector.extract_strided_slice %52 {offsets = [0, 0], sizes = [16, 32], strides = [1, 1]} : vector<16x128xf32> to vector<16x32xf32>
    %54 = arith.negf %53 : vector<16x32xf32>
    %55 = math.exp %54 : vector<16x32xf32>
    %cst_22 = arith.constant 1.000000e+00 : f32
    %56 = vector.broadcast %cst_22 : f32 to vector<16x32xf32>
    %57 = arith.addf %56, %55 : vector<16x32xf32>
    %58 = arith.divf %56, %57 : vector<16x32xf32>
    %59 = vector.extract_strided_slice %52 {offsets = [0, 32], sizes = [16, 32], strides = [1, 1]} : vector<16x128xf32> to vector<16x32xf32>
    %60 = arith.negf %59 : vector<16x32xf32>
    %61 = math.exp %60 : vector<16x32xf32>
    %cst_23 = arith.constant 1.000000e+00 : f32
    %62 = vector.broadcast %cst_23 : f32 to vector<16x32xf32>
    %63 = arith.addf %62, %61 : vector<16x32xf32>
    %64 = arith.divf %62, %63 : vector<16x32xf32>
    %65 = vector.extract_strided_slice %52 {offsets = [0, 64], sizes = [16, 32], strides = [1, 1]} : vector<16x128xf32> to vector<16x32xf32>
    %66 = vector.extract_strided_slice %52 {offsets = [0, 96], sizes = [16, 32], strides = [1, 1]} : vector<16x128xf32> to vector<16x32xf32>
    %67 = arith.mulf %58, %66 : vector<16x32xf32>
    %68 = arith.addf %65, %67 : vector<16x32xf32>
    %69 = math.tanh %68 : vector<16x32xf32>
    %cst_24 = arith.constant 1.000000e+00 : f32
    %70 = vector.broadcast %cst_24 : f32 to vector<16x32xf32>
    %71 = arith.subf %70, %64 : vector<16x32xf32>
    %72 = arith.mulf %71, %69 : vector<16x32xf32>
    %c0_25 = arith.constant 0 : index
    %c0_26 = arith.constant 0 : index
    %73 = vector.load %arg2[%c0_25, %c0_26] : memref<32x8xbf16, #tpu.memory_space<vmem>>, vector<32x8xbf16>
    %74 = arith.extf %73 : vector<32x8xbf16> to vector<32x8xf32>
    %c0_27 = arith.constant 0 : index
    %c0_28 = arith.constant 0 : index
    %75 = vector.load %arg3[%c0_27, %c0_28] : memref<8x32xbf16, #tpu.memory_space<vmem>>, vector<8x32xbf16>
    %76 = arith.extf %75 : vector<8x32xbf16> to vector<8x32xf32>
    %cst_29 = arith.constant dense<0.000000e+00> : vector<32x32xf32>
    %77 = tpu.matmul %74, %48, %cst_29 {dimension_numbers = #tpu.dot_dimension_numbers<[1], [0], [0], [1], [0, 0, 1, 1], [], []>} : vector<32x8xf32>, vector<8x32xf32>, vector<32x32xf32> -> vector<32x32xf32>
    %78 = vector.extract_strided_slice %77 {offsets = [0, 0], sizes = [16, 32], strides = [1, 1]} : vector<32x32xf32> to vector<16x32xf32>
    %79 = vector.extract_strided_slice %77 {offsets = [16, 0], sizes = [16, 32], strides = [1, 1]} : vector<32x32xf32> to vector<16x32xf32>
    %80 = tpu.concatenate %78, %79, %72 in 1 : vector<16x32xf32>, vector<16x32xf32>, vector<16x32xf32> -> vector<16x96xf32>
    %cst_30 = arith.constant dense<0.000000e+00> : vector<16x32xf32>
    %81 = tpu.matmul %80, %6, %cst_30 {dimension_numbers = #tpu.dot_dimension_numbers<[1], [0], [0], [1], [0, 0, 1, 1], [], []>} : vector<16x96xf32>, vector<96x32xf32>, vector<16x32xf32> -> vector<16x32xf32>
    %82 = vector.broadcast %14 : vector<1x32xf32> to vector<16x32xf32>
    %83 = arith.addf %81, %82 : vector<16x32xf32>
    %84 = arith.negf %83 : vector<16x32xf32>
    %85 = math.exp %84 : vector<16x32xf32>
    %cst_31 = arith.constant 1.000000e+00 : f32
    %86 = vector.broadcast %cst_31 : f32 to vector<16x32xf32>
    %87 = arith.addf %86, %85 : vector<16x32xf32>
    %88 = arith.divf %86, %87 : vector<16x32xf32>
    %89 = vector.extract_strided_slice %88 {offsets = [0, 0], sizes = [16, 1], strides = [1, 1]} : vector<16x32xf32> to vector<16x1xf32>
    %90 = vector.broadcast %89 : vector<16x1xf32> to vector<16x32xf32>
    %91 = arith.mulf %90, %78 : vector<16x32xf32>
    %92 = vector.extract_strided_slice %88 {offsets = [0, 1], sizes = [16, 1], strides = [1, 1]} : vector<16x32xf32> to vector<16x1xf32>
    %93 = vector.broadcast %92 : vector<16x1xf32> to vector<16x32xf32>
    %94 = arith.mulf %93, %79 : vector<16x32xf32>
    %95 = arith.addf %91, %94 : vector<16x32xf32>
    %96 = tpu.concatenate %95, %72 in 1 : vector<16x32xf32>, vector<16x32xf32> -> vector<16x64xf32>
    %cst_32 = arith.constant dense<0.000000e+00> : vector<16x128xf32>
    %97 = tpu.matmul %96, %1, %cst_32 {dimension_numbers = #tpu.dot_dimension_numbers<[1], [0], [0], [1], [0, 0, 1, 1], [], []>} : vector<16x64xf32>, vector<64x128xf32>, vector<16x128xf32> -> vector<16x128xf32>
    %98 = vector.broadcast %9 : vector<1x128xf32> to vector<16x128xf32>
    %99 = arith.addf %97, %98 : vector<16x128xf32>
    %100 = vector.extract_strided_slice %99 {offsets = [0, 0], sizes = [16, 32], strides = [1, 1]} : vector<16x128xf32> to vector<16x32xf32>
    %101 = arith.negf %100 : vector<16x32xf32>
    %102 = math.exp %101 : vector<16x32xf32>
    %cst_33 = arith.constant 1.000000e+00 : f32
    %103 = vector.broadcast %cst_33 : f32 to vector<16x32xf32>
    %104 = arith.addf %103, %102 : vector<16x32xf32>
    %105 = arith.divf %103, %104 : vector<16x32xf32>
    %106 = vector.extract_strided_slice %99 {offsets = [0, 32], sizes = [16, 32], strides = [1, 1]} : vector<16x128xf32> to vector<16x32xf32>
    %107 = arith.negf %106 : vector<16x32xf32>
    %108 = math.exp %107 : vector<16x32xf32>
    %cst_34 = arith.constant 1.000000e+00 : f32
    %109 = vector.broadcast %cst_34 : f32 to vector<16x32xf32>
    %110 = arith.addf %109, %108 : vector<16x32xf32>
    %111 = arith.divf %109, %110 : vector<16x32xf32>
    %112 = vector.extract_strided_slice %99 {offsets = [0, 64], sizes = [16, 32], strides = [1, 1]} : vector<16x128xf32> to vector<16x32xf32>
    %113 = vector.extract_strided_slice %99 {offsets = [0, 96], sizes = [16, 32], strides = [1, 1]} : vector<16x128xf32> to vector<16x32xf32>
    %114 = arith.mulf %105, %113 : vector<16x32xf32>
    %115 = arith.addf %112, %114 : vector<16x32xf32>
    %116 = math.tanh %115 : vector<16x32xf32>
    %cst_35 = arith.constant 1.000000e+00 : f32
    %117 = vector.broadcast %cst_35 : f32 to vector<16x32xf32>
    %118 = arith.subf %117, %111 : vector<16x32xf32>
    %119 = arith.mulf %118, %116 : vector<16x32xf32>
    %120 = arith.mulf %111, %72 : vector<16x32xf32>
    %121 = arith.addf %119, %120 : vector<16x32xf32>
    %122 = vector.extract_strided_slice %88 {offsets = [0, 2], sizes = [16, 1], strides = [1, 1]} : vector<16x32xf32> to vector<16x1xf32>
    %123 = vector.broadcast %122 : vector<16x1xf32> to vector<16x32xf32>
    %124 = arith.mulf %123, %72 : vector<16x32xf32>
    %125 = vector.extract_strided_slice %88 {offsets = [0, 3], sizes = [16, 1], strides = [1, 1]} : vector<16x32xf32> to vector<16x1xf32>
    %126 = vector.broadcast %125 : vector<16x1xf32> to vector<16x32xf32>
    %127 = arith.mulf %126, %72 : vector<16x32xf32>
    %128 = tpu.concatenate %124, %127 in 0 : vector<16x32xf32>, vector<16x32xf32> -> vector<32x32xf32>
    %cst_36 = arith.constant dense<0.000000e+00> : vector<8x32xf32>
    %129 = tpu.matmul %76, %128, %cst_36 {dimension_numbers = #tpu.dot_dimension_numbers<[1], [0], [0], [1], [0, 0, 1, 1], [], []>} : vector<8x32xf32>, vector<32x32xf32>, vector<8x32xf32> -> vector<8x32xf32>
    %130 = tpu.concatenate %129, %48 in 1 : vector<8x32xf32>, vector<8x32xf32> -> vector<8x64xf32>
    %cst_37 = arith.constant dense<0.000000e+00> : vector<8x128xf32>
    %131 = tpu.matmul %130, %0, %cst_37 {dimension_numbers = #tpu.dot_dimension_numbers<[1], [0], [0], [1], [0, 0, 1, 1], [], []>} : vector<8x64xf32>, vector<64x128xf32>, vector<8x128xf32> -> vector<8x128xf32>
    %132 = vector.broadcast %8 : vector<1x128xf32> to vector<8x128xf32>
    %133 = arith.addf %131, %132 : vector<8x128xf32>
    %134 = vector.extract_strided_slice %133 {offsets = [0, 0], sizes = [8, 32], strides = [1, 1]} : vector<8x128xf32> to vector<8x32xf32>
    %135 = arith.negf %134 : vector<8x32xf32>
    %136 = math.exp %135 : vector<8x32xf32>
    %cst_38 = arith.constant 1.000000e+00 : f32
    %137 = vector.broadcast %cst_38 : f32 to vector<8x32xf32>
    %138 = arith.addf %137, %136 : vector<8x32xf32>
    %139 = arith.divf %137, %138 : vector<8x32xf32>
    %140 = vector.extract_strided_slice %133 {offsets = [0, 32], sizes = [8, 32], strides = [1, 1]} : vector<8x128xf32> to vector<8x32xf32>
    %141 = arith.negf %140 : vector<8x32xf32>
    %142 = math.exp %141 : vector<8x32xf32>
    %cst_39 = arith.constant 1.000000e+00 : f32
    %143 = vector.broadcast %cst_39 : f32 to vector<8x32xf32>
    %144 = arith.addf %143, %142 : vector<8x32xf32>
    %145 = arith.divf %143, %144 : vector<8x32xf32>
    %146 = vector.extract_strided_slice %133 {offsets = [0, 64], sizes = [8, 32], strides = [1, 1]} : vector<8x128xf32> to vector<8x32xf32>
    %147 = vector.extract_strided_slice %133 {offsets = [0, 96], sizes = [8, 32], strides = [1, 1]} : vector<8x128xf32> to vector<8x32xf32>
    %148 = arith.mulf %139, %147 : vector<8x32xf32>
    %149 = arith.addf %146, %148 : vector<8x32xf32>
    %150 = math.tanh %149 : vector<8x32xf32>
    %cst_40 = arith.constant 1.000000e+00 : f32
    %151 = vector.broadcast %cst_40 : f32 to vector<8x32xf32>
    %152 = arith.subf %151, %145 : vector<8x32xf32>
    %153 = arith.mulf %152, %150 : vector<8x32xf32>
    %154 = arith.mulf %145, %48 : vector<8x32xf32>
    %155 = arith.addf %153, %154 : vector<8x32xf32>
    %cst_41 = arith.constant dense<0.000000e+00> : vector<32x32xf32>
    %156 = tpu.matmul %74, %155, %cst_41 {dimension_numbers = #tpu.dot_dimension_numbers<[1], [0], [0], [1], [0, 0, 1, 1], [], []>} : vector<32x8xf32>, vector<8x32xf32>, vector<32x32xf32> -> vector<32x32xf32>
    %157 = vector.extract_strided_slice %156 {offsets = [0, 0], sizes = [16, 32], strides = [1, 1]} : vector<32x32xf32> to vector<16x32xf32>
    %158 = vector.extract_strided_slice %156 {offsets = [16, 0], sizes = [16, 32], strides = [1, 1]} : vector<32x32xf32> to vector<16x32xf32>
    %159 = tpu.concatenate %157, %158, %121 in 1 : vector<16x32xf32>, vector<16x32xf32>, vector<16x32xf32> -> vector<16x96xf32>
    %cst_42 = arith.constant dense<0.000000e+00> : vector<16x32xf32>
    %160 = tpu.matmul %159, %6, %cst_42 {dimension_numbers = #tpu.dot_dimension_numbers<[1], [0], [0], [1], [0, 0, 1, 1], [], []>} : vector<16x96xf32>, vector<96x32xf32>, vector<16x32xf32> -> vector<16x32xf32>
    %161 = vector.broadcast %14 : vector<1x32xf32> to vector<16x32xf32>
    %162 = arith.addf %160, %161 : vector<16x32xf32>
    %163 = arith.negf %162 : vector<16x32xf32>
    %164 = math.exp %163 : vector<16x32xf32>
    %cst_43 = arith.constant 1.000000e+00 : f32
    %165 = vector.broadcast %cst_43 : f32 to vector<16x32xf32>
    %166 = arith.addf %165, %164 : vector<16x32xf32>
    %167 = arith.divf %165, %166 : vector<16x32xf32>
    %168 = vector.extract_strided_slice %167 {offsets = [0, 0], sizes = [16, 1], strides = [1, 1]} : vector<16x32xf32> to vector<16x1xf32>
    %169 = vector.broadcast %168 : vector<16x1xf32> to vector<16x32xf32>
    %170 = arith.mulf %169, %157 : vector<16x32xf32>
    %171 = vector.extract_strided_slice %167 {offsets = [0, 1], sizes = [16, 1], strides = [1, 1]} : vector<16x32xf32> to vector<16x1xf32>
    %172 = vector.broadcast %171 : vector<16x1xf32> to vector<16x32xf32>
    %173 = arith.mulf %172, %158 : vector<16x32xf32>
    %174 = arith.addf %170, %173 : vector<16x32xf32>
    %175 = tpu.concatenate %174, %121 in 1 : vector<16x32xf32>, vector<16x32xf32> -> vector<16x64xf32>
    %cst_44 = arith.constant dense<0.000000e+00> : vector<16x128xf32>
    %176 = tpu.matmul %175, %1, %cst_44 {dimension_numbers = #tpu.dot_dimension_numbers<[1], [0], [0], [1], [0, 0, 1, 1], [], []>} : vector<16x64xf32>, vector<64x128xf32>, vector<16x128xf32> -> vector<16x128xf32>
    %177 = vector.broadcast %9 : vector<1x128xf32> to vector<16x128xf32>
    %178 = arith.addf %176, %177 : vector<16x128xf32>
    %179 = vector.extract_strided_slice %178 {offsets = [0, 0], sizes = [16, 32], strides = [1, 1]} : vector<16x128xf32> to vector<16x32xf32>
    %180 = arith.negf %179 : vector<16x32xf32>
    %181 = math.exp %180 : vector<16x32xf32>
    %cst_45 = arith.constant 1.000000e+00 : f32
    %182 = vector.broadcast %cst_45 : f32 to vector<16x32xf32>
    %183 = arith.addf %182, %181 : vector<16x32xf32>
    %184 = arith.divf %182, %183 : vector<16x32xf32>
    %185 = vector.extract_strided_slice %178 {offsets = [0, 32], sizes = [16, 32], strides = [1, 1]} : vector<16x128xf32> to vector<16x32xf32>
    %186 = arith.negf %185 : vector<16x32xf32>
    %187 = math.exp %186 : vector<16x32xf32>
    %cst_46 = arith.constant 1.000000e+00 : f32
    %188 = vector.broadcast %cst_46 : f32 to vector<16x32xf32>
    %189 = arith.addf %188, %187 : vector<16x32xf32>
    %190 = arith.divf %188, %189 : vector<16x32xf32>
    %191 = vector.extract_strided_slice %178 {offsets = [0, 64], sizes = [16, 32], strides = [1, 1]} : vector<16x128xf32> to vector<16x32xf32>
    %192 = vector.extract_strided_slice %178 {offsets = [0, 96], sizes = [16, 32], strides = [1, 1]} : vector<16x128xf32> to vector<16x32xf32>
    %193 = arith.mulf %184, %192 : vector<16x32xf32>
    %194 = arith.addf %191, %193 : vector<16x32xf32>
    %195 = math.tanh %194 : vector<16x32xf32>
    %cst_47 = arith.constant 1.000000e+00 : f32
    %196 = vector.broadcast %cst_47 : f32 to vector<16x32xf32>
    %197 = arith.subf %196, %190 : vector<16x32xf32>
    %198 = arith.mulf %197, %195 : vector<16x32xf32>
    %199 = arith.mulf %190, %121 : vector<16x32xf32>
    %200 = arith.addf %198, %199 : vector<16x32xf32>
    %201 = vector.extract_strided_slice %167 {offsets = [0, 2], sizes = [16, 1], strides = [1, 1]} : vector<16x32xf32> to vector<16x1xf32>
    %202 = vector.broadcast %201 : vector<16x1xf32> to vector<16x32xf32>
    %203 = arith.mulf %202, %121 : vector<16x32xf32>
    %204 = vector.extract_strided_slice %167 {offsets = [0, 3], sizes = [16, 1], strides = [1, 1]} : vector<16x32xf32> to vector<16x1xf32>
    %205 = vector.broadcast %204 : vector<16x1xf32> to vector<16x32xf32>
    %206 = arith.mulf %205, %121 : vector<16x32xf32>
    %207 = tpu.concatenate %203, %206 in 0 : vector<16x32xf32>, vector<16x32xf32> -> vector<32x32xf32>
    %cst_48 = arith.constant dense<0.000000e+00> : vector<8x32xf32>
    %208 = tpu.matmul %76, %207, %cst_48 {dimension_numbers = #tpu.dot_dimension_numbers<[1], [0], [0], [1], [0, 0, 1, 1], [], []>} : vector<8x32xf32>, vector<32x32xf32>, vector<8x32xf32> -> vector<8x32xf32>
    %209 = tpu.concatenate %208, %155 in 1 : vector<8x32xf32>, vector<8x32xf32> -> vector<8x64xf32>
    %cst_49 = arith.constant dense<0.000000e+00> : vector<8x128xf32>
    %210 = tpu.matmul %209, %0, %cst_49 {dimension_numbers = #tpu.dot_dimension_numbers<[1], [0], [0], [1], [0, 0, 1, 1], [], []>} : vector<8x64xf32>, vector<64x128xf32>, vector<8x128xf32> -> vector<8x128xf32>
    %211 = vector.broadcast %8 : vector<1x128xf32> to vector<8x128xf32>
    %212 = arith.addf %210, %211 : vector<8x128xf32>
    %213 = vector.extract_strided_slice %212 {offsets = [0, 0], sizes = [8, 32], strides = [1, 1]} : vector<8x128xf32> to vector<8x32xf32>
    %214 = arith.negf %213 : vector<8x32xf32>
    %215 = math.exp %214 : vector<8x32xf32>
    %cst_50 = arith.constant 1.000000e+00 : f32
    %216 = vector.broadcast %cst_50 : f32 to vector<8x32xf32>
    %217 = arith.addf %216, %215 : vector<8x32xf32>
    %218 = arith.divf %216, %217 : vector<8x32xf32>
    %219 = vector.extract_strided_slice %212 {offsets = [0, 32], sizes = [8, 32], strides = [1, 1]} : vector<8x128xf32> to vector<8x32xf32>
    %220 = arith.negf %219 : vector<8x32xf32>
    %221 = math.exp %220 : vector<8x32xf32>
    %cst_51 = arith.constant 1.000000e+00 : f32
    %222 = vector.broadcast %cst_51 : f32 to vector<8x32xf32>
    %223 = arith.addf %222, %221 : vector<8x32xf32>
    %224 = arith.divf %222, %223 : vector<8x32xf32>
    %225 = vector.extract_strided_slice %212 {offsets = [0, 64], sizes = [8, 32], strides = [1, 1]} : vector<8x128xf32> to vector<8x32xf32>
    %226 = vector.extract_strided_slice %212 {offsets = [0, 96], sizes = [8, 32], strides = [1, 1]} : vector<8x128xf32> to vector<8x32xf32>
    %227 = arith.mulf %218, %226 : vector<8x32xf32>
    %228 = arith.addf %225, %227 : vector<8x32xf32>
    %229 = math.tanh %228 : vector<8x32xf32>
    %cst_52 = arith.constant 1.000000e+00 : f32
    %230 = vector.broadcast %cst_52 : f32 to vector<8x32xf32>
    %231 = arith.subf %230, %224 : vector<8x32xf32>
    %232 = arith.mulf %231, %229 : vector<8x32xf32>
    %233 = arith.mulf %224, %155 : vector<8x32xf32>
    %234 = arith.addf %232, %233 : vector<8x32xf32>
    %cst_53 = arith.constant dense<0.000000e+00> : vector<8x128xf32>
    %235 = tpu.matmul %234, %2, %cst_53 {dimension_numbers = #tpu.dot_dimension_numbers<[1], [0], [0], [1], [0, 0, 1, 1], [], []>} : vector<8x32xf32>, vector<32x128xf32>, vector<8x128xf32> -> vector<8x128xf32>
    %236 = vector.broadcast %10 : vector<1x128xf32> to vector<8x128xf32>
    %237 = arith.addf %235, %236 : vector<8x128xf32>
    %c0_54 = arith.constant 0 : index
    %c0_55 = arith.constant 0 : index
    %238 = vector.load %arg7[%c0_54, %c0_55] : memref<8x128xf32, #tpu.memory_space<vmem>>, vector<8x128xf32>
    tpu.vector_store %arg7[%c0_54, %c0_55], %237 {strides = array<i32>} : memref<8x128xf32, #tpu.memory_space<vmem>>, vector<8x128xf32>,
    %cst_56 = arith.constant dense<0.000000e+00> : vector<16x128xf32>
    %239 = tpu.matmul %200, %3, %cst_56 {dimension_numbers = #tpu.dot_dimension_numbers<[1], [0], [0], [1], [0, 0, 1, 1], [], []>} : vector<16x32xf32>, vector<32x128xf32>, vector<16x128xf32> -> vector<16x128xf32>
    %240 = vector.broadcast %11 : vector<1x128xf32> to vector<16x128xf32>
    %241 = arith.addf %239, %240 : vector<16x128xf32>
    %c0_57 = arith.constant 0 : index
    %c0_58 = arith.constant 0 : index
    %242 = vector.load %arg8[%c0_57, %c0_58] : memref<16x128xf32, #tpu.memory_space<vmem>>, vector<16x128xf32>
    tpu.vector_store %arg8[%c0_57, %c0_58], %241 {strides = array<i32>} : memref<16x128xf32, #tpu.memory_space<vmem>>, vector<16x128xf32>,
    return
  }
}

</mosaic_0001>

<llo_original>
// kernel: imp_forward.1
$region0: #{imp_forward.1}
  #allocation0 [shape = 'u32[]', space=smem, size = 0x4, offset = 0x4, fixed_abs, tag = 'smem constant byte address 0x4 - core index']
  #allocation1 [shape = 'u32[72,128]{1,0:T(1,128)}', space=vmem, size = 0x9000, scoped, tag = 'internal scratch']
  %s0 = inlined_call_operand.vmem [shape: f32[8,32], index: 0, kind: input, shape index: {}]
  %s1 = inlined_call_operand.vmem [shape: f32[16,32], index: 1, kind: input, shape index: {}]
  %s2 = inlined_call_operand.vmem [shape: bf16[32,8], index: 2, kind: input, shape index: {}]
  %s3 = inlined_call_operand.vmem [shape: bf16[8,32], index: 3, kind: input, shape index: {}]
  %s4 = inlined_call_operand.vmem [shape: f32[192,128], index: 4, kind: input, shape index: {}]
  %s5 = inlined_call_operand.vmem [shape: f32[160,32], index: 5, kind: input, shape index: {}]
  %s6 = inlined_call_operand.vmem [shape: f32[8,128], index: 6, kind: input, shape index: {}]
  %s7 = inlined_call_operand.hbm [shape: f32[8,128], index: 7, kind: output, shape index: {0}]
  %s8 = inlined_call_operand.hbm [shape: f32[16,128], index: 8, kind: output, shape index: {1}]
  %9 = xla_tuple %s7, %s8
  %s10 = sld [smem:[#allocation0]]
  $region46: #{imp_forward.1} parent=0
    _
  %s12 = ssub.s32 1, %s10
  %s13 = scalar_select 0, %s12, %s10
  $region1: #{imp_forward.1} parent=0
    #allocation2 [shape = 'u8[4096]{0}', space=vmem, size = 0x1000, scoped, tag = 'output window, operand 0, single buffered']
    #allocation3 [shape = 's32[1]{0}', space=sflag, size = 0x4, scoped, tag = 'scoped memory for imp_forward.1']
    #allocation4 [shape = 'u8[8192]{0}', space=vmem, size = 0x2000, scoped, tag = 'output window, operand 1, single buffered']
    #allocation5 [shape = 's32[1]{0}', space=sflag, size = 0x4, scoped, tag = 'scoped memory for imp_forward.1']
    %14 = vsyncpa [#allocation3], 0
    %15 = vsyncpa [#allocation5], 0
    // Predicated region
    $region2: #{imp_forward.1} parent=1 // pred_check
      _
    $region3: #{imp_forward.1} parent=1 // pred_check_branch
      %17 = sbr.rel (0) target = $region5
    $region4: #{imp_forward.1} parent=1 // pred_region
      _
    $region5: #{imp_forward.1} parent=1 // pred_fallthru
      _
    // Predicated region
    $region6: #{imp_forward.1} parent=1 // pred_check
      _
    $region7: #{imp_forward.1} parent=1 // pred_check_branch
      %19 = sbr.rel (0) target = $region9
    $region8: #{imp_forward.1} parent=1 // pred_region
      _
    $region9: #{imp_forward.1} parent=1 // pred_fallthru
      _
    // Predicated region
    $region10: #{imp_forward.1} parent=1 // pred_check
      _
    $region11: #{imp_forward.1} parent=1 // pred_check_branch
      %21 = sbr.rel (0) target = $region13
    $region12: #{imp_forward.1} parent=1 // pred_region
      _
    $region13: #{imp_forward.1} parent=1 // pred_fallthru
      _
    // Predicated region
    $region14: #{imp_forward.1} parent=1 // pred_check
      _
    $region15: #{imp_forward.1} parent=1 // pred_check_branch
      %23 = sbr.rel (0) target = $region17
    $region16: #{imp_forward.1} parent=1 // pred_region
      _
    $region17: #{imp_forward.1} parent=1 // pred_fallthru
      _
    // Predicated region
    $region18: #{imp_forward.1} parent=1 // pred_check
      _
    $region19: #{imp_forward.1} parent=1 // pred_check_branch
      %25 = sbr.rel (0) target = $region21
    $region20: #{imp_forward.1} parent=1 // pred_region
      _
    $region21: #{imp_forward.1} parent=1 // pred_fallthru
      _
    // Predicated region
    $region22: #{imp_forward.1} parent=1 // pred_check
      _
    $region23: #{imp_forward.1} parent=1 // pred_check_branch
      %27 = sbr.rel (0) target = $region25
    $region24: #{imp_forward.1} parent=1 // pred_region
      _
    $region25: #{imp_forward.1} parent=1 // pred_fallthru
      _
    // Predicated region
    $region26: #{imp_forward.1} parent=1 // pred_check
      _
    $region27: #{imp_forward.1} parent=1 // pred_check_branch
      %29 = sbr.rel (0) target = $region29
    $region28: #{imp_forward.1} parent=1 // pred_region
      _
    $region29: #{imp_forward.1} parent=1 // pred_fallthru
      _
    %v30 = vld [vmem:[%s4] sm:$0xff]
    %v31 = vld [vmem:[%s4 + $0x8] sm:$0xff]
    %v32 = vld [vmem:[%s4 + $0x10] sm:$0xff]
    %v33 = vld [vmem:[%s4 + $0x18] sm:$0xff]
    %v34 = vld [vmem:[%s4 + $0x20] sm:$0xff]
    %v35 = vld [vmem:[%s4 + $0x28] sm:$0xff]
    %v36 = vld [vmem:[%s4 + $0x30] sm:$0xff]
    %v37 = vld [vmem:[%s4 + $0x38] sm:$0xff]
    %v38 = vld [vmem:[%s4 + $0x40] sm:$0xff]
    %v39 = vld [vmem:[%s4 + $0x48] sm:$0xff]
    %v40 = vld [vmem:[%s4 + $0x50] sm:$0xff]
    %v41 = vld [vmem:[%s4 + $0x58] sm:$0xff]
    %v42 = vld [vmem:[%s4 + $0x60] sm:$0xff]
    %v43 = vld [vmem:[%s4 + $0x68] sm:$0xff]
    %v44 = vld [vmem:[%s4 + $0x70] sm:$0xff]
    %v45 = vld [vmem:[%s4 + $0x78] sm:$0xff]
    %v46 = vld [vmem:[%s4 + $0x80] sm:$0xff]
    %v47 = vld [vmem:[%s4 + $0x88] sm:$0xff]
    %v48 = vld [vmem:[%s4 + $0x90] sm:$0xff]
    %v49 = vld [vmem:[%s4 + $0x98] sm:$0xff]
    %v50 = vld [vmem:[%s4 + $0xa0] sm:$0xff]
    %v51 = vld [vmem:[%s4 + $0xa8] sm:$0xff]
    %v52 = vld [vmem:[%s4 + $0xb0] sm:$0xff]
    %v53 = vld [vmem:[%s4 + $0xb8] sm:$0xff]
    %v54 = vld [vmem:[%s5] sm:$0xff]
    %v55 = vld [vmem:[%s5 + $0x8] sm:$0xff]
    %v56 = vld [vmem:[%s5 + $0x10] sm:$0xff]
    %v57 = vld [vmem:[%s5 + $0x18] sm:$0xff]
    %v58 = vld [vmem:[%s5 + $0x20] sm:$0xff]
    %v59 = vld [vmem:[%s5 + $0x28] sm:$0xff]
    %v60 = vld [vmem:[%s5 + $0x30] sm:$0xff]
    %v61 = vld [vmem:[%s5 + $0x38] sm:$0xff]
    %v62 = vld [vmem:[%s5 + $0x40] sm:$0xff]
    %v63 = vld [vmem:[%s5 + $0x48] sm:$0xff]
    %v64 = vld [vmem:[%s5 + $0x50] sm:$0xff]
    %v65 = vld [vmem:[%s5 + $0x58] sm:$0xff]
    %v66 = vld [vmem:[%s5 + $0x60] sm:$0xff]
    %v67 = vld [vmem:[%s5 + $0x68] sm:$0xff]
    %v68 = vld [vmem:[%s5 + $0x70] sm:$0xff]
    %v69 = vld [vmem:[%s5 + $0x78] sm:$0xff]
    %v70 = vld [vmem:[%s5 + $0x80] sm:$0xff]
    %v71 = vld [vmem:[%s5 + $0x88] sm:$0xff]
    %v72 = vld [vmem:[%s5 + $0x90] sm:$0xff]
    %v73 = vld [vmem:[%s5 + $0x98] sm:$0xff]
    %v74 = vld [vmem:[%s6] sm:$0xff]
    %v75 = vld [vmem:[%s0] sm:$0xff]
    %v76 = vperm.slane %v74, 4
    %vm77 = vcmask 261120
    %v79 = vsel %vm77, %v75, 0
    %81 = vmatpush.msra.mxu0 0.0
    %82 = vmatpush.msra.mxu0 0.0
    %83 = vmatpush.msra.mxu0 0.0
    %84 = vmatpush.msra.mxu0 0.0
    %85 = vmatpush.msra.mxu0 0.0
    %86 = vmatpush.msra.mxu0 0.0
    %87 = vmatpush.msra.mxu0 0.0
    %88 = vmatpush.msra.mxu0 0.0
    %89 = vmatpush.msra.mxu0 0.0
    %90 = vmatpush.msra.mxu0 0.0
    %91 = vmatpush.msra.mxu0 0.0
    %92 = vmatpush.msra.mxu0 0.0
    %93 = vmatpush.msra.mxu0 %v57
    %94 = vmatpush.msra.mxu0 %v56
    %95 = vmatpush.msra.mxu0 %v55
    %96 = vmatpush.msra.mxu0 %v54
    %97 = vmatmul.f32.gmra.mxu0 %v79
    %v98 = vpop.f32.mrf.mxu0
    %v99 = vadd.f32 %v76, %v98
    %100 = vdwg.mxu0
    %v101 = vld [vmem:[%s1] sm:$0xff]
    %v102 = vld [vmem:[%s1 + $0x8] sm:$0xff]
    %v103 = vperm.slane %v74, 5
    %v105 = vsel %vm77, %v101, 0
    %v108 = vsel %vm77, %v102, 0
    %110 = vmatpush.msra.mxu0 0.0
    %111 = vmatpush.msra.mxu0 0.0
    %112 = vmatpush.msra.mxu0 0.0
    %113 = vmatpush.msra.mxu0 0.0
    %114 = vmatpush.msra.mxu0 0.0
    %115 = vmatpush.msra.mxu0 0.0
    %116 = vmatpush.msra.mxu0 0.0
    %117 = vmatpush.msra.mxu0 0.0
    %118 = vmatpush.msra.mxu0 0.0
    %119 = vmatpush.msra.mxu0 0.0
    %120 = vmatpush.msra.mxu0 0.0
    %121 = vmatpush.msra.mxu0 0.0
    %122 = vmatpush.msra.mxu0 %v61
    %123 = vmatpush.msra.mxu0 %v60
    %124 = vmatpush.msra.mxu0 %v59
    %125 = vmatpush.msra.mxu0 %v58
    %126 = vmatmul.f32.gmra.mxu0 %v105
    %v127 = vpop.f32.mrf.mxu0
    %v128 = vadd.f32 %v103, %v127
    %129 = vmatmul.f32.gmra.mxu0 %v108
    %v130 = vpop.f32.mrf.mxu0
    %v131 = vadd.f32 %v103, %v130
    %132 = vdwg.mxu0
    %v133 = vmax.f32 %v128, 0.0
    %v134 = vmax.f32 %v131, 0.0
    %v135 = vperm.slane %v74, 0
    %v137 = vsel %vm77, %v99, 0
    %139 = vmatpush.msra.mxu0 0.0
    %140 = vmatpush.msra.mxu0 0.0
    %141 = vmatpush.msra.mxu0 0.0
    %142 = vmatpush.msra.mxu0 0.0
    %143 = vmatpush.msra.mxu0 0.0
    %144 = vmatpush.msra.mxu0 0.0
    %145 = vmatpush.msra.mxu0 0.0
    %146 = vmatpush.msra.mxu0 0.0
    %147 = vmatpush.msra.mxu0 0.0
    %148 = vmatpush.msra.mxu0 0.0
    %149 = vmatpush.msra.mxu0 0.0
    %150 = vmatpush.msra.mxu0 0.0
    %151 = vmatpush.msra.mxu0 %v33
    %152 = vmatpush.msra.mxu0 %v32
    %153 = vmatpush.msra.mxu0 %v31
    %154 = vmatpush.msra.mxu0 %v30
    %155 = vmatmul.f32.gmra.mxu0 %v137
    %v156 = vpop.f32.mrf.mxu0
    %v157 = vadd.f32 %v135, %v156
    %158 = vdwg.mxu0
    %v159 = vxor.u32 %v157, 2147483648
    %v160 = vmul.f32 %v159, 1.442695
    %v161 = vpow.pop %v160
    %v162 = vadd.f32 %v161, 1.0
    %v163 = vrcp.pop %v162
    %v164 = vmul.f32 %v162, %v163
    %v165 = vsub.f32 1.0, %v164
    %v166 = vmul.f32 %v163, %v165
    %v167 = vadd.f32 %v163, %v166
    %vm168 = vweird.f32 %v162
    %vm169 = vweird.f32 %v163
    %vm170 = vmor %vm168, %vm169
    %v171 = vsel %vm170, %v163, %v167
    %v172 = vand.u32 2147483647, %v162
    %vm173 = vcmp.eq.f32.partialorder %v172, 8.507059e+37
    %v174 = vand.u32 %v162, 2147483648
    %v175 = vor.u32 1.1754944e-38, %v174
    %v176 = vsel %vm173, %v175, %v171
    %v177 = vmul.f32 1.0, %v176
    %179 = vrot.lane.b32.xlu0 %v157, 32
    %v180 = vpop.permute.xlu0 %179
    %v182 = vmul.f32 %v177, %v180
    %184 = vrot.lane.b32.xlu0 %v182, 64
    %v185 = vpop.permute.xlu0 %184
    %v187 = vadd.f32 %v157, %v185
    %v188 = vtanh.pop %v187
    %v189 = vsub.f32 1.0, %v177
    %191 = vrot.lane.b32.xlu0 %v188, 96
    %v192 = vpop.permute.xlu0 %191
    %v194 = vmul.f32 %v189, %v192
    %v195 = vperm.slane %v74, 1
    %v197 = vsel %vm77, %v133, 0
    %v200 = vsel %vm77, %v134, 0
    %202 = vmatpush.msra.mxu0 0.0
    %203 = vmatpush.msra.mxu0 0.0
    %204 = vmatpush.msra.mxu0 0.0
    %205 = vmatpush.msra.mxu0 0.0
    %206 = vmatpush.msra.mxu0 0.0
    %207 = vmatpush.msra.mxu0 0.0
    %208 = vmatpush.msra.mxu0 0.0
    %209 = vmatpush.msra.mxu0 0.0
    %210 = vmatpush.msra.mxu0 0.0
    %211 = vmatpush.msra.mxu0 0.0
    %212 = vmatpush.msra.mxu0 0.0
    %213 = vmatpush.msra.mxu0 0.0
    %214 = vmatpush.msra.mxu0 %v41
    %215 = vmatpush.msra.mxu0 %v40
    %216 = vmatpush.msra.mxu0 %v39
    %217 = vmatpush.msra.mxu0 %v38
    %218 = vmatmul.f32.gmra.mxu0 %v197
    %v219 = vpop.f32.mrf.mxu0
    %v220 = vadd.f32 %v195, %v219
    %221 = vmatmul.f32.gmra.mxu0 %v200
    %v222 = vpop.f32.mrf.mxu0
    %v223 = vadd.f32 %v195, %v222
    %224 = vdwg.mxu0
    %v225 = vxor.u32 %v220, 2147483648
    %v226 = vxor.u32 %v223, 2147483648
    %v227 = vmul.f32 %v225, 1.442695
    %v228 = vpow.pop %v227
    %v229 = vmul.f32 %v226, 1.442695
    %v230 = vpow.pop %v229
    %v231 = vadd.f32 %v228, 1.0
    %v232 = vadd.f32 %v230, 1.0
    %v233 = vrcp.pop %v231
    %v234 = vmul.f32 %v231, %v233
    %v235 = vsub.f32 1.0, %v234
    %v236 = vmul.f32 %v233, %v235
    %v237 = vadd.f32 %v233, %v236
    %vm238 = vweird.f32 %v231
    %vm239 = vweird.f32 %v233
    %vm240 = vmor %vm238, %vm239
    %v241 = vsel %vm240, %v233, %v237
    %v242 = vand.u32 2147483647, %v231
    %vm243 = vcmp.eq.f32.partialorder %v242, 8.507059e+37
    %v244 = vand.u32 %v231, 2147483648
    %v245 = vor.u32 1.1754944e-38, %v244
    %v246 = vsel %vm243, %v245, %v241
    %v247 = vmul.f32 1.0, %v246
    %v248 = vrcp.pop %v232
    %v249 = vmul.f32 %v232, %v248
    %v250 = vsub.f32 1.0, %v249
    %v251 = vmul.f32 %v248, %v250
    %v252 = vadd.f32 %v248, %v251
    %vm253 = vweird.f32 %v232
    %vm254 = vweird.f32 %v248
    %vm255 = vmor %vm253, %vm254
    %v256 = vsel %vm255, %v248, %v252
    %v257 = vand.u32 2147483647, %v232
    %vm258 = vcmp.eq.f32.partialorder %v257, 8.507059e+37
    %v259 = vand.u32 %v232, 2147483648
    %v260 = vor.u32 1.1754944e-38, %v259
    %v261 = vsel %vm258, %v260, %v256
    %v262 = vmul.f32 1.0, %v261
    %265 = vrot.lane.b32.xlu0 %v220, 32
    %v266 = vpop.permute.xlu0 %265
    %267 = vrot.lane.b32.xlu0 %v223, 32
    %v268 = vpop.permute.xlu0 %267
    %v271 = vmul.f32 %v247, %v266
    %v272 = vmul.f32 %v262, %v268
    %275 = vrot.lane.b32.xlu0 %v271, 64
    %v276 = vpop.permute.xlu0 %275
    %277 = vrot.lane.b32.xlu0 %v272, 64
    %v278 = vpop.permute.xlu0 %277
    %v281 = vadd.f32 %v220, %v276
    %v282 = vadd.f32 %v223, %v278
    %v283 = vtanh.pop %v281
    %v284 = vtanh.pop %v282
    %v285 = vsub.f32 1.0, %v247
    %v286 = vsub.f32 1.0, %v262
    %289 = vrot.lane.b32.xlu0 %v283, 96
    %v290 = vpop.permute.xlu0 %289
    %291 = vrot.lane.b32.xlu0 %v284, 96
    %v292 = vpop.permute.xlu0 %291
    %v295 = vmul.f32 %v285, %v290
    %v296 = vmul.f32 %v286, %v292
    %v297 = vld [vmem:[%s2] sm:$0xf]
    %v298 = vld [vmem:[%s2 + $0x4] sm:$0xf]
    %v299 = vld [vmem:[%s2 + $0x8] sm:$0xf]
    %v300 = vld [vmem:[%s2 + $0xc] sm:$0xf]
    %v301 = vunpack.c.l.bf16 %v297
    %v302 = vunpack.c.l.bf16 %v298
    %v303 = vunpack.c.l.bf16 %v299
    %v304 = vunpack.c.l.bf16 %v300
    %v305 = vld [vmem:[%s3] sm:$0xf]
    %v306 = vunpack.c.l.bf16 %v305
    %308 = vrot.lane.b32.xlu0 %v194, 96
    %v309 = vpop.permute.xlu0 %308
    %vm311 = vcmask 64512
    %v313 = vsel %vm311, %v301, 0
    %v316 = vsel %vm311, %v302, 0
    %v319 = vsel %vm311, %v303, 0
    %v322 = vsel %vm311, %v304, 0
    %324 = vmatpush.msra.mxu0 0.0
    %325 = vmatpush.msra.mxu0 0.0
    %326 = vmatpush.msra.mxu0 0.0
    %327 = vmatpush.msra.mxu0 0.0
    %328 = vmatpush.msra.mxu0 0.0
    %329 = vmatpush.msra.mxu0 0.0
    %330 = vmatpush.msra.mxu0 0.0
    %331 = vmatpush.msra.mxu0 0.0
    %332 = vmatpush.msra.mxu0 0.0
    %333 = vmatpush.msra.mxu0 0.0
    %334 = vmatpush.msra.mxu0 0.0
    %335 = vmatpush.msra.mxu0 0.0
    %336 = vmatpush.msra.mxu0 0.0
    %337 = vmatpush.msra.mxu0 0.0
    %338 = vmatpush.msra.mxu0 0.0
    %339 = vmatpush.msra.mxu0 %v309
    %340 = vmatmul.f32.gmra.mxu0 %v313
    %v341 = vpop.f32.mrf.mxu0
    %v342 = vadd.f32 0.0, %v341
    %343 = vmatmul.f32.gmra.mxu0 %v316
    %v344 = vpop.f32.mrf.mxu0
    %v345 = vadd.f32 0.0, %v344
    %346 = vmatmul.f32.gmra.mxu0 %v319
    %v347 = vpop.f32.mrf.mxu0
    %v348 = vadd.f32 0.0, %v347
    %349 = vmatmul.f32.gmra.mxu0 %v322
    %v350 = vpop.f32.mrf.mxu0
    %v351 = vadd.f32 0.0, %v350
    %352 = vdwg.mxu0
    %355 = vrot.lane.b32.xlu0 %v348, 32
    %v356 = vpop.permute.xlu0 %355
    %357 = vrot.lane.b32.xlu0 %v351, 32
    %v358 = vpop.permute.xlu0 %357
    %363 = vrot.lane.b32.xlu0 %v295, 32
    %v364 = vpop.permute.xlu0 %363
    %365 = vrot.lane.b32.xlu0 %v296, 32
    %v366 = vpop.permute.xlu0 %365
    %v369 = vsel %vm77, %v342, %v356
    %v370 = vsel %vm77, %v345, %v358
    %vm371 = vcmask 523264
    %v372 = vsel %vm371, %v369, %v364
    %v373 = vsel %vm371, %v370, %v366
    %v374 = vperm.slane %v74, 6
    %vm375 = vcmask 785408
    %v377 = vsel %vm375, %v372, 0
    %v380 = vsel %vm375, %v373, 0
    %382 = vmatpush.msra.mxu0 0.0
    %383 = vmatpush.msra.mxu0 0.0
    %384 = vmatpush.msra.mxu0 0.0
    %385 = vmatpush.msra.mxu0 0.0
    %386 = vmatpush.msra.mxu0 %v73
    %387 = vmatpush.msra.mxu0 %v72
    %388 = vmatpush.msra.mxu0 %v71
    %389 = vmatpush.msra.mxu0 %v70
    %390 = vmatpush.msra.mxu0 %v69
    %391 = vmatpush.msra.mxu0 %v68
    %392 = vmatpush.msra.mxu0 %v67
    %393 = vmatpush.msra.mxu0 %v66
    %394 = vmatpush.msra.mxu0 %v65
    %395 = vmatpush.msra.mxu0 %v64
    %396 = vmatpush.msra.mxu0 %v63
    %397 = vmatpush.msra.mxu0 %v62
    %398 = vmatmul.f32.gmra.mxu0 %v377
    %v399 = vpop.f32.mrf.mxu0
    %v400 = vadd.f32 %v374, %v399
    %401 = vmatmul.f32.gmra.mxu0 %v380
    %v402 = vpop.f32.mrf.mxu0
    %v403 = vadd.f32 %v374, %v402
    %404 = vdwg.mxu0
    %v405 = vxor.u32 %v400, 2147483648
    %v406 = vxor.u32 %v403, 2147483648
    %v407 = vmul.f32 %v405, 1.442695
    %v408 = vpow.pop %v407
    %v409 = vmul.f32 %v406, 1.442695
    %v410 = vpow.pop %v409
    %v411 = vadd.f32 %v408, 1.0
    %v412 = vadd.f32 %v410, 1.0
    %v413 = vrcp.pop %v411
    %v414 = vmul.f32 %v411, %v413
    %v415 = vsub.f32 1.0, %v414
    %v416 = vmul.f32 %v413, %v415
    %v417 = vadd.f32 %v413, %v416
    %vm418 = vweird.f32 %v411
    %vm419 = vweird.f32 %v413
    %vm420 = vmor %vm418, %vm419
    %v421 = vsel %vm420, %v413, %v417
    %v422 = vand.u32 2147483647, %v411
    %vm423 = vcmp.eq.f32.partialorder %v422, 8.507059e+37
    %v424 = vand.u32 %v411, 2147483648
    %v425 = vor.u32 1.1754944e-38, %v424
    %v426 = vsel %vm423, %v425, %v421
    %v427 = vmul.f32 1.0, %v426
    %v428 = vrcp.pop %v412
    %v429 = vmul.f32 %v412, %v428
    %v430 = vsub.f32 1.0, %v429
    %v431 = vmul.f32 %v428, %v430
    %v432 = vadd.f32 %v428, %v431
    %vm433 = vweird.f32 %v412
    %vm434 = vweird.f32 %v428
    %vm435 = vmor %vm433, %vm434
    %v436 = vsel %vm435, %v428, %v432
    %v437 = vand.u32 2147483647, %v412
    %vm438 = vcmp.eq.f32.partialorder %v437, 8.507059e+37
    %v439 = vand.u32 %v412, 2147483648
    %v440 = vor.u32 1.1754944e-38, %v439
    %v441 = vsel %vm438, %v440, %v436
    %v442 = vmul.f32 1.0, %v441
    %444 = vset.pattern.permute.xlu0 0
    %445 = vperm.xlu0 %444, %v427
    %v446 = vpop.permute.xlu0 %445
    %449 = vset.pattern.permute.xlu0 0
    %450 = vperm.xlu0 %449, %v442
    %v451 = vpop.permute.xlu0 %450
    %v453 = vmul.f32 %v446, %v342
    %v454 = vmul.f32 %v451, %v345
    %455 = vset.pattern.permute.xlu0 1
    %456 = vperm.xlu0 %455, %v427
    %v457 = vpop.permute.xlu0 %456
    %459 = vset.pattern.permute.xlu0 1
    %460 = vperm.xlu0 %459, %v442
    %v461 = vpop.permute.xlu0 %460
    %v463 = vmul.f32 %v457, %v348
    %v464 = vmul.f32 %v461, %v351
    %v465 = vadd.f32 %v453, %v463
    %v466 = vadd.f32 %v454, %v464
    %v467 = vsel %vm77, %v465, %v295
    %v468 = vsel %vm77, %v466, %v296
    %v470 = vsel %vm371, %v467, 0
    %v473 = vsel %vm371, %v468, 0
    %475 = vmatpush.msra.mxu0 0.0
    %476 = vmatpush.msra.mxu0 0.0
    %477 = vmatpush.msra.mxu0 0.0
    %478 = vmatpush.msra.mxu0 0.0
    %479 = vmatpush.msra.mxu0 0.0
    %480 = vmatpush.msra.mxu0 0.0
    %481 = vmatpush.msra.mxu0 0.0
    %482 = vmatpush.msra.mxu0 0.0
    %483 = vmatpush.msra.mxu0 %v45
    %484 = vmatpush.msra.mxu0 %v44
    %485 = vmatpush.msra.mxu0 %v43
    %486 = vmatpush.msra.mxu0 %v42
    %487 = vmatpush.msra.mxu0 %v41
    %488 = vmatpush.msra.mxu0 %v40
    %489 = vmatpush.msra.mxu0 %v39
    %490 = vmatpush.msra.mxu0 %v38
    %491 = vmatmul.f32.gmra.mxu0 %v470
    %v492 = vpop.f32.mrf.mxu0
    %v493 = vadd.f32 %v195, %v492
    %494 = vmatmul.f32.gmra.mxu0 %v473
    %v495 = vpop.f32.mrf.mxu0
    %v496 = vadd.f32 %v195, %v495
    %497 = vdwg.mxu0
    %v498 = vxor.u32 %v493, 2147483648
    %v499 = vxor.u32 %v496, 2147483648
    %v500 = vmul.f32 %v498, 1.442695
    %v501 = vpow.pop %v500
    %v502 = vmul.f32 %v499, 1.442695
    %v503 = vpow.pop %v502
    %v504 = vadd.f32 %v501, 1.0
    %v505 = vadd.f32 %v503, 1.0
    %v506 = vrcp.pop %v504
    %v507 = vmul.f32 %v504, %v506
    %v508 = vsub.f32 1.0, %v507
    %v509 = vmul.f32 %v506, %v508
    %v510 = vadd.f32 %v506, %v509
    %vm511 = vweird.f32 %v504
    %vm512 = vweird.f32 %v506
    %vm513 = vmor %vm511, %vm512
    %v514 = vsel %vm513, %v506, %v510
    %v515 = vand.u32 2147483647, %v504
    %vm516 = vcmp.eq.f32.partialorder %v515, 8.507059e+37
    %v517 = vand.u32 %v504, 2147483648
    %v518 = vor.u32 1.1754944e-38, %v517
    %v519 = vsel %vm516, %v518, %v514
    %v520 = vmul.f32 1.0, %v519
    %v521 = vrcp.pop %v505
    %v522 = vmul.f32 %v505, %v521
    %v523 = vsub.f32 1.0, %v522
    %v524 = vmul.f32 %v521, %v523
    %v525 = vadd.f32 %v521, %v524
    %vm526 = vweird.f32 %v505
    %vm527 = vweird.f32 %v521
    %vm528 = vmor %vm526, %vm527
    %v529 = vsel %vm528, %v521, %v525
    %v530 = vand.u32 2147483647, %v505
    %vm531 = vcmp.eq.f32.partialorder %v530, 8.507059e+37
    %v532 = vand.u32 %v505, 2147483648
    %v533 = vor.u32 1.1754944e-38, %v532
    %v534 = vsel %vm531, %v533, %v529
    %v535 = vmul.f32 1.0, %v534
    %538 = vrot.lane.b32.xlu0 %v493, 32
    %v539 = vpop.permute.xlu0 %538
    %540 = vrot.lane.b32.xlu0 %v496, 32
    %v541 = vpop.permute.xlu0 %540
    %v544 = vmul.f32 %v520, %v539
    %v545 = vmul.f32 %v535, %v541
    %548 = vrot.lane.b32.xlu0 %v544, 64
    %v549 = vpop.permute.xlu0 %548
    %550 = vrot.lane.b32.xlu0 %v545, 64
    %v551 = vpop.permute.xlu0 %550
    %v554 = vadd.f32 %v493, %v549
    %v555 = vadd.f32 %v496, %v551
    %v556 = vtanh.pop %v554
    %v557 = vtanh.pop %v555
    %v558 = vsub.f32 1.0, %v520
    %v559 = vsub.f32 1.0, %v535
    %562 = vrot.lane.b32.xlu0 %v556, 96
    %v563 = vpop.permute.xlu0 %562
    %564 = vrot.lane.b32.xlu0 %v557, 96
    %v565 = vpop.permute.xlu0 %564
    %v568 = vmul.f32 %v558, %v563
    %v569 = vmul.f32 %v559, %v565
    %v570 = vmul.f32 %v520, %v295
    %v571 = vmul.f32 %v535, %v296
    %v572 = vadd.f32 %v568, %v570
    %v573 = vadd.f32 %v569, %v571
    %574 = vset.pattern.permute.xlu0 2
    %575 = vperm.xlu0 %574, %v427
    %v576 = vpop.permute.xlu0 %575
    %578 = vset.pattern.permute.xlu0 2
    %579 = vperm.xlu0 %578, %v442
    %v580 = vpop.permute.xlu0 %579
    %v582 = vmul.f32 %v576, %v295
    %v583 = vmul.f32 %v580, %v296
    %584 = vset.pattern.permute.xlu0 3
    %585 = vperm.xlu0 %584, %v427
    %v586 = vpop.permute.xlu0 %585
    %588 = vset.pattern.permute.xlu0 3
    %589 = vperm.xlu0 %588, %v442
    %v590 = vpop.permute.xlu0 %589
    %v592 = vmul.f32 %v586, %v295
    %v593 = vmul.f32 %v590, %v296
    %598 = vrot.lane.b32.xlu0 %v582, 96
    %v599 = vpop.permute.xlu0 %598
    %600 = vrot.lane.b32.xlu0 %v583, 96
    %v601 = vpop.permute.xlu0 %600
    %602 = vrot.lane.b32.xlu0 %v592, 96
    %v603 = vpop.permute.xlu0 %602
    %604 = vrot.lane.b32.xlu0 %v593, 96
    %v605 = vpop.permute.xlu0 %604
    %v611 = vsel %vm77, %v306, 0
    %613 = vmatpush.msra.mxu0 0.0
    %614 = vmatpush.msra.mxu0 0.0
    %615 = vmatpush.msra.mxu0 0.0
    %616 = vmatpush.msra.mxu0 0.0
    %617 = vmatpush.msra.mxu0 0.0
    %618 = vmatpush.msra.mxu0 0.0
    %619 = vmatpush.msra.mxu0 0.0
    %620 = vmatpush.msra.mxu0 0.0
    %621 = vmatpush.msra.mxu0 0.0
    %622 = vmatpush.msra.mxu0 0.0
    %623 = vmatpush.msra.mxu0 0.0
    %624 = vmatpush.msra.mxu0 0.0
    %625 = vmatpush.msra.mxu0 %v605
    %626 = vmatpush.msra.mxu0 %v603
    %627 = vmatpush.msra.mxu0 %v601
    %628 = vmatpush.msra.mxu0 %v599
    %629 = vmatmul.f32.gmra.mxu0 %v611
    %v630 = vpop.f32.mrf.mxu0
    %v631 = vadd.f32 0.0, %v630
    %632 = vdwg.mxu0
    %v633 = vsel %vm77, %v631, %v194
    %v635 = vsel %vm371, %v633, 0
    %637 = vmatpush.msra.mxu0 0.0
    %638 = vmatpush.msra.mxu0 0.0
    %639 = vmatpush.msra.mxu0 0.0
    %640 = vmatpush.msra.mxu0 0.0
    %641 = vmatpush.msra.mxu0 0.0
    %642 = vmatpush.msra.mxu0 0.0
    %643 = vmatpush.msra.mxu0 0.0
    %644 = vmatpush.msra.mxu0 0.0
    %645 = vmatpush.msra.mxu0 %v37
    %646 = vmatpush.msra.mxu0 %v36
    %647 = vmatpush.msra.mxu0 %v35
    %648 = vmatpush.msra.mxu0 %v34
    %649 = vmatpush.msra.mxu0 %v33
    %650 = vmatpush.msra.mxu0 %v32
    %651 = vmatpush.msra.mxu0 %v31
    %652 = vmatpush.msra.mxu0 %v30
    %653 = vmatmul.f32.gmra.mxu0 %v635
    %v654 = vpop.f32.mrf.mxu0
    %v655 = vadd.f32 %v135, %v654
    %656 = vdwg.mxu0
    %v657 = vxor.u32 %v655, 2147483648
    %v658 = vmul.f32 %v657, 1.442695
    %v659 = vpow.pop %v658
    %v660 = vadd.f32 %v659, 1.0
    %v661 = vrcp.pop %v660
    %v662 = vmul.f32 %v660, %v661
    %v663 = vsub.f32 1.0, %v662
    %v664 = vmul.f32 %v661, %v663
    %v665 = vadd.f32 %v661, %v664
    %vm666 = vweird.f32 %v660
    %vm667 = vweird.f32 %v661
    %vm668 = vmor %vm666, %vm667
    %v669 = vsel %vm668, %v661, %v665
    %v670 = vand.u32 2147483647, %v660
    %vm671 = vcmp.eq.f32.partialorder %v670, 8.507059e+37
    %v672 = vand.u32 %v660, 2147483648
    %v673 = vor.u32 1.1754944e-38, %v672
    %v674 = vsel %vm671, %v673, %v669
    %v675 = vmul.f32 1.0, %v674
    %677 = vrot.lane.b32.xlu0 %v655, 32
    %v678 = vpop.permute.xlu0 %677
    %v680 = vmul.f32 %v675, %v678
    %682 = vrot.lane.b32.xlu0 %v680, 64
    %v683 = vpop.permute.xlu0 %682
    %v685 = vadd.f32 %v655, %v683
    %v686 = vtanh.pop %v685
    %v687 = vsub.f32 1.0, %v675
    %689 = vrot.lane.b32.xlu0 %v686, 96
    %v690 = vpop.permute.xlu0 %689
    %v692 = vmul.f32 %v687, %v690
    %v693 = vmul.f32 %v675, %v194
    %v694 = vadd.f32 %v692, %v693
    %696 = vrot.lane.b32.xlu0 %v694, 96
    %v697 = vpop.permute.xlu0 %696
    %699 = vmatpush.msra.mxu0 0.0
    %700 = vmatpush.msra.mxu0 0.0
    %701 = vmatpush.msra.mxu0 0.0
    %702 = vmatpush.msra.mxu0 0.0
    %703 = vmatpush.msra.mxu0 0.0
    %704 = vmatpush.msra.mxu0 0.0
    %705 = vmatpush.msra.mxu0 0.0
    %706 = vmatpush.msra.mxu0 0.0
    %707 = vmatpush.msra.mxu0 0.0
    %708 = vmatpush.msra.mxu0 0.0
    %709 = vmatpush.msra.mxu0 0.0
    %710 = vmatpush.msra.mxu0 0.0
    %711 = vmatpush.msra.mxu0 0.0
    %712 = vmatpush.msra.mxu0 0.0
    %713 = vmatpush.msra.mxu0 0.0
    %714 = vmatpush.msra.mxu0 %v697
    %715 = vmatmul.f32.gmra.mxu0 %v313
    %v716 = vpop.f32.mrf.mxu0
    %v717 = vadd.f32 0.0, %v716
    %718 = vmatmul.f32.gmra.mxu0 %v316
    %v719 = vpop.f32.mrf.mxu0
    %v720 = vadd.f32 0.0, %v719
    %721 = vmatmul.f32.gmra.mxu0 %v319
    %v722 = vpop.f32.mrf.mxu0
    %v723 = vadd.f32 0.0, %v722
    %724 = vmatmul.f32.gmra.mxu0 %v322
    %v725 = vpop.f32.mrf.mxu0
    %v726 = vadd.f32 0.0, %v725
    %727 = vdwg.mxu0
    %730 = vrot.lane.b32.xlu0 %v723, 32
    %v731 = vpop.permute.xlu0 %730
    %732 = vrot.lane.b32.xlu0 %v726, 32
    %v733 = vpop.permute.xlu0 %732
    %738 = vrot.lane.b32.xlu0 %v572, 32
    %v739 = vpop.permute.xlu0 %738
    %740 = vrot.lane.b32.xlu0 %v573, 32
    %v741 = vpop.permute.xlu0 %740
    %v744 = vsel %vm77, %v717, %v731
    %v745 = vsel %vm77, %v720, %v733
    %v746 = vsel %vm371, %v744, %v739
    %v747 = vsel %vm371, %v745, %v741
    %v749 = vsel %vm375, %v746, 0
    %v752 = vsel %vm375, %v747, 0
    %754 = vmatpush.msra.mxu0 0.0
    %755 = vmatpush.msra.mxu0 0.0
    %756 = vmatpush.msra.mxu0 0.0
    %757 = vmatpush.msra.mxu0 0.0
    %758 = vmatpush.msra.mxu0 %v73
    %759 = vmatpush.msra.mxu0 %v72
    %760 = vmatpush.msra.mxu0 %v71
    %761 = vmatpush.msra.mxu0 %v70
    %762 = vmatpush.msra.mxu0 %v69
    %763 = vmatpush.msra.mxu0 %v68
    %764 = vmatpush.msra.mxu0 %v67
    %765 = vmatpush.msra.mxu0 %v66
    %766 = vmatpush.msra.mxu0 %v65
    %767 = vmatpush.msra.mxu0 %v64
    %768 = vmatpush.msra.mxu0 %v63
    %769 = vmatpush.msra.mxu0 %v62
    %770 = vmatmul.f32.gmra.mxu0 %v749
    %v771 = vpop.f32.mrf.mxu0
    %v772 = vadd.f32 %v374, %v771
    %773 = vmatmul.f32.gmra.mxu0 %v752
    %v774 = vpop.f32.mrf.mxu0
    %v775 = vadd.f32 %v374, %v774
    %776 = vdwg.mxu0
    %v777 = vxor.u32 %v772, 2147483648
    %v778 = vxor.u32 %v775, 2147483648
    %v779 = vmul.f32 %v777, 1.442695
    %v780 = vpow.pop %v779
    %v781 = vmul.f32 %v778, 1.442695
    %v782 = vpow.pop %v781
    %v783 = vadd.f32 %v780, 1.0
    %v784 = vadd.f32 %v782, 1.0
    %v785 = vrcp.pop %v783
    %v786 = vmul.f32 %v783, %v785
    %v787 = vsub.f32 1.0, %v786
    %v788 = vmul.f32 %v785, %v787
    %v789 = vadd.f32 %v785, %v788
    %vm790 = vweird.f32 %v783
    %vm791 = vweird.f32 %v785
    %vm792 = vmor %vm790, %vm791
    %v793 = vsel %vm792, %v785, %v789
    %v794 = vand.u32 2147483647, %v783
    %vm795 = vcmp.eq.f32.partialorder %v794, 8.507059e+37
    %v796 = vand.u32 %v783, 2147483648
    %v797 = vor.u32 1.1754944e-38, %v796
    %v798 = vsel %vm795, %v797, %v793
    %v799 = vmul.f32 1.0, %v798
    %v800 = vrcp.pop %v784
    %v801 = vmul.f32 %v784, %v800
    %v802 = vsub.f32 1.0, %v801
    %v803 = vmul.f32 %v800, %v802
    %v804 = vadd.f32 %v800, %v803
    %vm805 = vweird.f32 %v784
    %vm806 = vweird.f32 %v800
    %vm807 = vmor %vm805, %vm806
    %v808 = vsel %vm807, %v800, %v804
    %v809 = vand.u32 2147483647, %v784
    %vm810 = vcmp.eq.f32.partialorder %v809, 8.507059e+37
    %v811 = vand.u32 %v784, 2147483648
    %v812 = vor.u32 1.1754944e-38, %v811
    %v813 = vsel %vm810, %v812, %v808
    %v814 = vmul.f32 1.0, %v813
    %816 = vset.pattern.permute.xlu0 0
    %817 = vperm.xlu0 %816, %v799
    %v818 = vpop.permute.xlu0 %817
    %821 = vset.pattern.permute.xlu0 0
    %822 = vperm.xlu0 %821, %v814
    %v823 = vpop.permute.xlu0 %822
    %v825 = vmul.f32 %v818, %v717
    %v826 = vmul.f32 %v823, %v720
    %827 = vset.pattern.permute.xlu0 1
    %828 = vperm.xlu0 %827, %v799
    %v829 = vpop.permute.xlu0 %828
    %831 = vset.pattern.permute.xlu0 1
    %832 = vperm.xlu0 %831, %v814
    %v833 = vpop.permute.xlu0 %832
    %v835 = vmul.f32 %v829, %v723
    %v836 = vmul.f32 %v833, %v726
    %v837 = vadd.f32 %v825, %v835
    %v838 = vadd.f32 %v826, %v836
    %v839 = vsel %vm77, %v837, %v572
    %v840 = vsel %vm77, %v838, %v573
    %v842 = vsel %vm371, %v839, 0
    %v845 = vsel %vm371, %v840, 0
    %847 = vmatpush.msra.mxu0 0.0
    %848 = vmatpush.msra.mxu0 0.0
    %849 = vmatpush.msra.mxu0 0.0
    %850 = vmatpush.msra.mxu0 0.0
    %851 = vmatpush.msra.mxu0 0.0
    %852 = vmatpush.msra.mxu0 0.0
    %853 = vmatpush.msra.mxu0 0.0
    %854 = vmatpush.msra.mxu0 0.0
    %855 = vmatpush.msra.mxu0 %v45
    %856 = vmatpush.msra.mxu0 %v44
    %857 = vmatpush.msra.mxu0 %v43
    %858 = vmatpush.msra.mxu0 %v42
    %859 = vmatpush.msra.mxu0 %v41
    %860 = vmatpush.msra.mxu0 %v40
    %861 = vmatpush.msra.mxu0 %v39
    %862 = vmatpush.msra.mxu0 %v38
    %863 = vmatmul.f32.gmra.mxu0 %v842
    %v864 = vpop.f32.mrf.mxu0
    %v865 = vadd.f32 %v195, %v864
    %866 = vmatmul.f32.gmra.mxu0 %v845
    %v867 = vpop.f32.mrf.mxu0
    %v868 = vadd.f32 %v195, %v867
    %869 = vdwg.mxu0
    %v870 = vxor.u32 %v865, 2147483648
    %v871 = vxor.u32 %v868, 2147483648
    %v872 = vmul.f32 %v870, 1.442695
    %v873 = vpow.pop %v872
    %v874 = vmul.f32 %v871, 1.442695
    %v875 = vpow.pop %v874
    %v876 = vadd.f32 %v873, 1.0
    %v877 = vadd.f32 %v875, 1.0
    %v878 = vrcp.pop %v876
    %v879 = vmul.f32 %v876, %v878
    %v880 = vsub.f32 1.0, %v879
    %v881 = vmul.f32 %v878, %v880
    %v882 = vadd.f32 %v878, %v881
    %vm883 = vweird.f32 %v876
    %vm884 = vweird.f32 %v878
    %vm885 = vmor %vm883, %vm884
    %v886 = vsel %vm885, %v878, %v882
    %v887 = vand.u32 2147483647, %v876
    %vm888 = vcmp.eq.f32.partialorder %v887, 8.507059e+37
    %v889 = vand.u32 %v876, 2147483648
    %v890 = vor.u32 1.1754944e-38, %v889
    %v891 = vsel %vm888, %v890, %v886
    %v892 = vmul.f32 1.0, %v891
    %v893 = vrcp.pop %v877
    %v894 = vmul.f32 %v877, %v893
    %v895 = vsub.f32 1.0, %v894
    %v896 = vmul.f32 %v893, %v895
    %v897 = vadd.f32 %v893, %v896
    %vm898 = vweird.f32 %v877
    %vm899 = vweird.f32 %v893
    %vm900 = vmor %vm898, %vm899
    %v901 = vsel %vm900, %v893, %v897
    %v902 = vand.u32 2147483647, %v877
    %vm903 = vcmp.eq.f32.partialorder %v902, 8.507059e+37
    %v904 = vand.u32 %v877, 2147483648
    %v905 = vor.u32 1.1754944e-38, %v904
    %v906 = vsel %vm903, %v905, %v901
    %v907 = vmul.f32 1.0, %v906
    %910 = vrot.lane.b32.xlu0 %v865, 32
    %v911 = vpop.permute.xlu0 %910
    %912 = vrot.lane.b32.xlu0 %v868, 32
    %v913 = vpop.permute.xlu0 %912
    %v916 = vmul.f32 %v892, %v911
    %v917 = vmul.f32 %v907, %v913
    %920 = vrot.lane.b32.xlu0 %v916, 64
    %v921 = vpop.permute.xlu0 %920
    %922 = vrot.lane.b32.xlu0 %v917, 64
    %v923 = vpop.permute.xlu0 %922
    %v926 = vadd.f32 %v865, %v921
    %v927 = vadd.f32 %v868, %v923
    %v928 = vtanh.pop %v926
    %v929 = vtanh.pop %v927
    %v930 = vsub.f32 1.0, %v892
    %v931 = vsub.f32 1.0, %v907
    %934 = vrot.lane.b32.xlu0 %v928, 96
    %v935 = vpop.permute.xlu0 %934
    %936 = vrot.lane.b32.xlu0 %v929, 96
    %v937 = vpop.permute.xlu0 %936
    %v940 = vmul.f32 %v930, %v935
    %v941 = vmul.f32 %v931, %v937
    %v942 = vmul.f32 %v892, %v572
    %v943 = vmul.f32 %v907, %v573
    %v944 = vadd.f32 %v940, %v942
    %v945 = vadd.f32 %v941, %v943
    %946 = vset.pattern.permute.xlu0 2
    %947 = vperm.xlu0 %946, %v799
    %v948 = vpop.permute.xlu0 %947
    %950 = vset.pattern.permute.xlu0 2
    %951 = vperm.xlu0 %950, %v814
    %v952 = vpop.permute.xlu0 %951
    %v954 = vmul.f32 %v948, %v572
    %v955 = vmul.f32 %v952, %v573
    %956 = vset.pattern.permute.xlu0 3
    %957 = vperm.xlu0 %956, %v799
    %v958 = vpop.permute.xlu0 %957
    %960 = vset.pattern.permute.xlu0 3
    %961 = vperm.xlu0 %960, %v814
    %v962 = vpop.permute.xlu0 %961
    %v964 = vmul.f32 %v958, %v572
    %v965 = vmul.f32 %v962, %v573
    %970 = vrot.lane.b32.xlu0 %v954, 96
    %v971 = vpop.permute.xlu0 %970
    %972 = vrot.lane.b32.xlu0 %v955, 96
    %v973 = vpop.permute.xlu0 %972
    %974 = vrot.lane.b32.xlu0 %v964, 96
    %v975 = vpop.permute.xlu0 %974
    %976 = vrot.lane.b32.xlu0 %v965, 96
    %v977 = vpop.permute.xlu0 %976
    %982 = vmatpush.msra.mxu0 0.0
    %983 = vmatpush.msra.mxu0 0.0
    %984 = vmatpush.msra.mxu0 0.0
    %985 = vmatpush.msra.mxu0 0.0
    %986 = vmatpush.msra.mxu0 0.0
    %987 = vmatpush.msra.mxu0 0.0
    %988 = vmatpush.msra.mxu0 0.0
    %989 = vmatpush.msra.mxu0 0.0
    %990 = vmatpush.msra.mxu0 0.0
    %991 = vmatpush.msra.mxu0 0.0
    %992 = vmatpush.msra.mxu0 0.0
    %993 = vmatpush.msra.mxu0 0.0
    %994 = vmatpush.msra.mxu0 %v977
    %995 = vmatpush.msra.mxu0 %v975
    %996 = vmatpush.msra.mxu0 %v973
    %997 = vmatpush.msra.mxu0 %v971
    %998 = vmatmul.f32.gmra.mxu0 %v611
    %v999 = vpop.f32.mrf.mxu0
    %v1000 = vadd.f32 0.0, %v999
    %1001 = vdwg.mxu0
    %v1002 = vsel %vm77, %v1000, %v694
    %v1004 = vsel %vm371, %v1002, 0
    %1006 = vmatpush.msra.mxu0 0.0
    %1007 = vmatpush.msra.mxu0 0.0
    %1008 = vmatpush.msra.mxu0 0.0
    %1009 = vmatpush.msra.mxu0 0.0
    %1010 = vmatpush.msra.mxu0 0.0
    %1011 = vmatpush.msra.mxu0 0.0
    %1012 = vmatpush.msra.mxu0 0.0
    %1013 = vmatpush.msra.mxu0 0.0
    %1014 = vmatpush.msra.mxu0 %v37
    %1015 = vmatpush.msra.mxu0 %v36
    %1016 = vmatpush.msra.mxu0 %v35
    %1017 = vmatpush.msra.mxu0 %v34
    %1018 = vmatpush.msra.mxu0 %v33
    %1019 = vmatpush.msra.mxu0 %v32
    %1020 = vmatpush.msra.mxu0 %v31
    %1021 = vmatpush.msra.mxu0 %v30
    %1022 = vmatmul.f32.gmra.mxu0 %v1004
    %v1023 = vpop.f32.mrf.mxu0
    %v1024 = vadd.f32 %v135, %v1023
    %1025 = vdwg.mxu0
    %v1026 = vxor.u32 %v1024, 2147483648
    %v1027 = vmul.f32 %v1026, 1.442695
    %v1028 = vpow.pop %v1027
    %v1029 = vadd.f32 %v1028, 1.0
    %v1030 = vrcp.pop %v1029
    %v1031 = vmul.f32 %v1029, %v1030
    %v1032 = vsub.f32 1.0, %v1031
    %v1033 = vmul.f32 %v1030, %v1032
    %v1034 = vadd.f32 %v1030, %v1033
    %vm1035 = vweird.f32 %v1029
    %vm1036 = vweird.f32 %v1030
    %vm1037 = vmor %vm1035, %vm1036
    %v1038 = vsel %vm1037, %v1030, %v1034
    %v1039 = vand.u32 2147483647, %v1029
    %vm1040 = vcmp.eq.f32.partialorder %v1039, 8.507059e+37
    %v1041 = vand.u32 %v1029, 2147483648
    %v1042 = vor.u32 1.1754944e-38, %v1041
    %v1043 = vsel %vm1040, %v1042, %v1038
    %v1044 = vmul.f32 1.0, %v1043
    %1046 = vrot.lane.b32.xlu0 %v1024, 32
    %v1047 = vpop.permute.xlu0 %1046
    %v1049 = vmul.f32 %v1044, %v1047
    %1051 = vrot.lane.b32.xlu0 %v1049, 64
    %v1052 = vpop.permute.xlu0 %1051
    %v1054 = vadd.f32 %v1024, %v1052
    %v1055 = vtanh.pop %v1054
    %v1056 = vsub.f32 1.0, %v1044
    %1058 = vrot.lane.b32.xlu0 %v1055, 96
    %v1059 = vpop.permute.xlu0 %1058
    %v1061 = vmul.f32 %v1056, %v1059
    %v1062 = vmul.f32 %v1044, %v694
    %v1063 = vadd.f32 %v1061, %v1062
    %v1064 = vperm.slane %v74, 2
    %1066 = vrot.lane.b32.xlu0 %v1063, 96
    %v1067 = vpop.permute.xlu0 %1066
    %v1068 = vsel %vm77, %v1067, 0
    %1070 = vmatpush.msra.mxu0 0.0
    %1071 = vmatpush.msra.mxu0 0.0
    %1072 = vmatpush.msra.mxu0 0.0
    %1073 = vmatpush.msra.mxu0 0.0
    %1074 = vmatpush.msra.mxu0 0.0
    %1075 = vmatpush.msra.mxu0 0.0
    %1076 = vmatpush.msra.mxu0 0.0
    %1077 = vmatpush.msra.mxu0 0.0
    %1078 = vmatpush.msra.mxu0 0.0
    %1079 = vmatpush.msra.mxu0 0.0
    %1080 = vmatpush.msra.mxu0 0.0
    %1081 = vmatpush.msra.mxu0 0.0
    %1082 = vmatpush.msra.mxu0 %v49
    %1083 = vmatpush.msra.mxu0 %v48
    %1084 = vmatpush.msra.mxu0 %v47
    %1085 = vmatpush.msra.mxu0 %v46
    %1086 = vmatmul.f32.gmra.mxu0 %v1068
    %v1087 = vpop.f32.mrf.mxu0
    %v1088 = vadd.f32 %v1064, %v1087
    %1089 = vdwg.mxu0
    %1090 = vst [vmem:[#allocation2] sm:$0xff] %v1088
    %v1091 = vperm.slane %v74, 3
    %1094 = vrot.lane.b32.xlu0 %v944, 96
    %v1095 = vpop.permute.xlu0 %1094
    %1096 = vrot.lane.b32.xlu0 %v945, 96
    %v1097 = vpop.permute.xlu0 %1096
    %v1098 = vsel %vm77, %v1095, 0
    %v1100 = vsel %vm77, %v1097, 0
    %1102 = vmatpush.msra.mxu0 0.0
    %1103 = vmatpush.msra.mxu0 0.0
    %1104 = vmatpush.msra.mxu0 0.0
    %1105 = vmatpush.msra.mxu0 0.0
    %1106 = vmatpush.msra.mxu0 0.0
    %1107 = vmatpush.msra.mxu0 0.0
    %1108 = vmatpush.msra.mxu0 0.0
    %1109 = vmatpush.msra.mxu0 0.0
    %1110 = vmatpush.msra.mxu0 0.0
    %1111 = vmatpush.msra.mxu0 0.0
    %1112 = vmatpush.msra.mxu0 0.0
    %1113 = vmatpush.msra.mxu0 0.0
    %1114 = vmatpush.msra.mxu0 %v53
    %1115 = vmatpush.msra.mxu0 %v52
    %1116 = vmatpush.msra.mxu0 %v51
    %1117 = vmatpush.msra.mxu0 %v50
    %1118 = vmatmul.f32.gmra.mxu0 %v1098
    %v1119 = vpop.f32.mrf.mxu0
    %v1120 = vadd.f32 %v1091, %v1119
    %1121 = vmatmul.f32.gmra.mxu0 %v1100
    %v1122 = vpop.f32.mrf.mxu0
    %v1123 = vadd.f32 %v1091, %v1122
    %1124 = vdwg.mxu0
    %1125 = vst [vmem:[#allocation4] sm:$0xff] %v1120
    %1126 = vst [vmem:[#allocation4 + $0x8] sm:$0xff] %v1123
    // Predicated region
    $region30: #{imp_forward.1} parent=1 // pred_check
      _
    $region31: #{imp_forward.1} parent=1 // pred_check_branch
      %1128 = sbr.rel (0) target = $region33
    $region32: #{imp_forward.1} parent=1 // pred_region
      %1130 = vsyncadd [#allocation3], 0
      %s1132 = sshll.u32 [#allocation2], 4
      %s1133 = int_to_ptr.vmem [resolvable:$true] %s1132
      %s1134 = sshll.u32 %s7, 4
      %s1135 = int_to_ptr.hbm [resolvable:$true] %s1134
      %1137 = dma.vmem_to_hbm [thread:$0]  %s1133, 128, %s1135, [#allocation3]
    $region33: #{imp_forward.1} parent=1 // pred_fallthru
      _
    // Predicated region
    $region34: #{imp_forward.1} parent=1 // pred_check
      _
    $region35: #{imp_forward.1} parent=1 // pred_check_branch
      %1139 = sbr.rel (0) target = $region37
    $region36: #{imp_forward.1} parent=1 // pred_region
      %1141 = vsyncadd [#allocation5], 0
      %s1142 = sshll.u32 [#allocation4], 4
      %s1143 = int_to_ptr.vmem [resolvable:$true] %s1142
      %s1144 = sshll.u32 %s8, 4
      %s1145 = int_to_ptr.hbm [resolvable:$true] %s1144
      %1150 = dma.vmem_to_hbm [thread:$0]  %s1143, 256, %s1145, [#allocation5], 128, 128, 8
    $region37: #{imp_forward.1} parent=1 // pred_fallthru
      _
    // Predicated region
    $region38: #{imp_forward.1} parent=1 // pred_check
      _
    $region39: #{imp_forward.1} parent=1 // pred_check_branch
      %1152 = sbr.rel (0) target = $region41
    $region40: #{imp_forward.1} parent=1 // pred_region
      %1154 = dma.done [#allocation3], 128
    $region41: #{imp_forward.1} parent=1 // pred_fallthru
      _
    // Predicated region
    $region42: #{imp_forward.1} parent=1 // pred_check
      _
    $region43: #{imp_forward.1} parent=1 // pred_check_branch
      %1156 = sbr.rel (0) target = $region45
    $region44: #{imp_forward.1} parent=1 // pred_region
      %1158 = dma.done [#allocation5], 256
    $region45: #{imp_forward.1} parent=1 // pred_fallthru
      _
    %1159 = vsyncpa [#allocation3], 1
    %1160 = vsyncpa [#allocation5], 1

</llo_original>
